<compile_context>
chip_gen: v6e
topology: v6e:2x2x1
jax: 0.10.0
libtpu: 0.0.40
codegen_flags: <defaults>
</compile_context>

<pallas_src>
import functools

import jax
import jax.numpy as jnp
from jax import lax
from jax.experimental import pallas as pl
from jax.experimental.pallas import tpu as pltpu


def mha_fused_kernel(x_ref, wqkv_ref, bqkv_ref, wo_ref, bo_ref, o_ref,
                     qkv_ref, ctx_ref, *, n_heads, head_dim, q_tile):
    # Block shapes (per grid point (b, qi)):
    #   x_ref    : (1, T, E)   bf16  (constant across qi -> DMA'd once per b)
    #   wqkv_ref : (E, 3E)     bf16  (resident, single-buffered, scale folded into Q cols)
    #   bqkv_ref : (1, 3E)     f32
    #   wo_ref   : (E, E)      bf16  (resident, single-buffered)
    #   bo_ref   : (1, E)      f32
    #   o_ref    : (1, tq, E)  f32
    # Scratch:
    #   qkv_ref  : (T, 3E)     bf16  VMEM (full-sequence Q/K/V, persists across qi)
    #   ctx_ref  : (tq, E)     bf16  VMEM (per-head context, replaces concatenate)
    E = n_heads * head_dim
    qi = pl.program_id(1)

    # Fused Q/K/V projection for the whole sequence, once per batch element.
    # bf16 x bf16 -> f32 accumulation on the MXU; bias add in f32; stored bf16.
    @pl.when(qi == 0)
    def _():
        qkv_ref[...] = (jnp.dot(x_ref[0], wqkv_ref[...],
                                preferred_element_type=jnp.float32)
                        + bqkv_ref[...]).astype(jnp.bfloat16)

    q_start = pl.multiple_of(qi * q_tile, q_tile)
    for h in range(n_heads):                       # static unrolled head loop
        lo, hi = h * head_dim, (h + 1) * head_dim
        q = qkv_ref[pl.ds(q_start, q_tile), lo:hi]          # (tq, D) bf16 (pre-scaled)
        k = qkv_ref[:, E + lo:E + hi]                       # (T,  D) bf16
        v = qkv_ref[:, 2 * E + lo:2 * E + hi]               # (T,  D) bf16

        # q @ k^T by contracting the head_dim axis directly (no explicit transpose).
        s = lax.dot_general(q, k,
                            dimension_numbers=(((1,), (1,)), ((), ())),
                            preferred_element_type=jnp.float32)   # (tq, T)

        # Numerically-stable softmax in f32; reciprocal goes to the (otherwise idle) EUP.
        s = s - jnp.max(s, axis=-1, keepdims=True)
        e = jnp.exp(s)
        p = e * pl.reciprocal(jnp.sum(e, axis=-1, keepdims=True), approx=True)

        ctx_ref[:, lo:hi] = jnp.dot(p.astype(jnp.bfloat16), v,
                                    preferred_element_type=jnp.float32
                                    ).astype(jnp.bfloat16)  # (tq, D)

    # Output projection over the concatenated heads (already contiguous in ctx_ref).
    out = jnp.dot(ctx_ref[...], wo_ref[...],
                  preferred_element_type=jnp.float32) + bo_ref[...]
    o_ref[0] = out                                          # lane-dense (tq, E) f32 store
    # TODO(synk): optional attention mask not implemented (mask=None path only).


def prepare_params(params, n_heads):
    """One-time weight preparation (hoisted out of the forward path).

    Fuses per-head Q/K/V weights into a single (E, 3E) bf16 operand with
    head-major columns, folds 1/sqrt(head_dim) into the Q columns/bias, and
    pre-casts the output projection to bf16.
    """
    H, E, D = params["wq"].shape
    assert H == n_heads and H * D == E
    scale = 1.0 / (D ** 0.5)

    def cat_w(w):                    # (H, E, D) -> (E, H*D), head-major columns
        return jnp.transpose(w, (1, 0, 2)).reshape(E, H * D)

    def cat_b(b):                    # (H, 1, D) -> (1, H*D)
        return b.reshape(1, H * D)

    wqkv = jnp.concatenate([cat_w(params["wq"]) * scale,
                            cat_w(params["wk"]),
                            cat_w(params["wv"])], axis=1)
    bqkv = jnp.concatenate([cat_b(params["bq"]) * scale,
                            cat_b(params["bk"]),
                            cat_b(params["bv"])], axis=1)
    return {
        "n_heads": int(H),
        "head_dim": int(D),
        "wqkv": wqkv.astype(jnp.bfloat16),              # (E, 3E)
        "bqkv": bqkv.astype(jnp.float32),               # (1, 3E)
        "wo": params["wo"].astype(jnp.bfloat16),        # (E, E)  pre-transposed for x @ W
        "bo": params["bo"].astype(jnp.float32),         # (1, E)
    }


def multi_head_attention(x, prepared):
    """x: (B, T, E) float32.  prepared: output of prepare_params()."""
    B, T, E = x.shape
    H = prepared["n_heads"]
    D = prepared["head_dim"]
    assert H * D == E

    wqkv, bqkv = prepared["wqkv"], prepared["bqkv"]
    wo, bo = prepared["wo"], prepared["bo"]

    # Query-tile size: MXU-sized tiles for production T, single tile for small T.
    if T % 256 == 0:
        q_tile = 256
    elif T % 128 == 0:
        q_tile = 128
    else:
        q_tile = T
    n_q_tiles = T // q_tile

    # Cast activations to bf16 once (halves input DMA + removes per-step casts).
    x_bf16 = x.astype(jnp.bfloat16)

    # Advisory cost estimate (QKV proj + 2 attention matmuls per head + out proj).
    flops = int(B * (8 * T * E * E + 4 * T * T * E))
    transcendentals = int(B * H * T * T)
    bytes_accessed = int(B * T * E * (2 + 4)        # x in (bf16) + out (f32)
                         + 2 * (3 * E * E + E * E)  # bf16 weights
                         + 4 * 4 * E)               # f32 biases

    # VMEM residency: single-buffered weights + double-buffered x/out blocks
    # + qkv/ctx scratch + score tile (with 2x headroom).
    resident = (wqkv.size * 2 + wo.size * 2 + (bqkv.size + bo.size) * 4
                + 2 * (T * E * 2)                   # x block (bf16), double-buffered
                + 2 * (q_tile * E * 4)              # out block (f32), double-buffered
                + T * 3 * E * 2                     # qkv scratch (bf16)
                + q_tile * E * 2                    # ctx scratch (bf16)
                + q_tile * T * 4)                   # f32 score tile / softmax temps
    vmem_limit = int(min(64 << 20, max(32 << 20, 2 * resident + (4 << 20))))

    kernel = functools.partial(mha_fused_kernel, n_heads=H, head_dim=D, q_tile=q_tile)

    def build_call(single_buffer_weights):
        def const_spec(shape):
            idx = lambda b, qi: (0,) * len(shape)
            if single_buffer_weights:
                # Weight block index never changes -> one VMEM copy is enough.
                return pl.BlockSpec(shape, idx, pipeline_mode=pl.Buffered(1))
            return pl.BlockSpec(shape, idx)

        return pl.pallas_call(
            kernel,
            out_shape=jax.ShapeDtypeStruct((B, T, E), jnp.float32),
            grid_spec=pltpu.PrefetchScalarGridSpec(
                num_scalar_prefetch=0,
                grid=(B, n_q_tiles),
                in_specs=[
                    pl.BlockSpec((1, T, E), lambda b, qi: (b, 0, 0)),  # x (per-batch, DMA'd once per b)
                    const_spec((E, 3 * E)),                            # wqkv (resident)
                    const_spec((1, 3 * E)),                            # bqkv
                    const_spec((E, E)),                                # wo (resident)
                    const_spec((1, E)),                                # bo
                ],
                out_specs=pl.BlockSpec((1, q_tile, E), lambda b, qi: (b, qi, 0)),
                scratch_shapes=[
                    pltpu.VMEM((T, 3 * E), jnp.bfloat16),              # qkv scratch
                    pltpu.VMEM((q_tile, E), jnp.bfloat16),             # per-head context
                ],
            ),
            compiler_params=pltpu.CompilerParams(
                # Batch axis is independent -> shards across TensorCores on v7x.
                # The query-tile axis reuses the per-core qkv scratch -> "arbitrary".
                dimension_semantics=("parallel", "arbitrary"),
                vmem_limit_bytes=vmem_limit,
            ),
            cost_estimate=pl.CostEstimate(
                flops=flops, transcendentals=transcendentals,
                bytes_accessed=bytes_accessed),
        )

    try:
        out = build_call(True)(x_bf16, wqkv, bqkv, wo, bo)
    except Exception:
        # Fallback for jax versions without pipeline_mode / single-buffering support.
        out = build_call(False)(x_bf16, wqkv, bqkv, wo, bo)
    return out


def init_params(key, embedd_dim, n_heads):
    """Deterministic synthetic parameters matching the PyTorch module's shapes."""
    head_dim = embedd_dim // n_heads
    keys = jax.random.split(key, 8)
    s_in = 1.0 / jnp.sqrt(jnp.float32(embedd_dim))
    # per-head Q/K/V Linear(E, D): stored pre-transposed as (H, E, D) for x @ W
    params = {
        "wq": jax.random.normal(keys[0], (n_heads, embedd_dim, head_dim), jnp.float32) * s_in,
        "wk": jax.random.normal(keys[1], (n_heads, embedd_dim, head_dim), jnp.float32) * s_in,
        "wv": jax.random.normal(keys[2], (n_heads, embedd_dim, head_dim), jnp.float32) * s_in,
        "bq": jax.random.normal(keys[3], (n_heads, 1, head_dim), jnp.float32) * 0.02,
        "bk": jax.random.normal(keys[4], (n_heads, 1, head_dim), jnp.float32) * 0.02,
        "bv": jax.random.normal(keys[5], (n_heads, 1, head_dim), jnp.float32) * 0.02,
        # output Linear(E, E): stored pre-transposed as (E, E) for x @ W
        "wo": jax.random.normal(keys[6], (embedd_dim, embedd_dim), jnp.float32) * s_in,
        "bo": (jax.random.normal(keys[7], (1, embedd_dim), jnp.float32) * 0.02),
    }
    return params


def reference_mha(x, params):
    """Pure-JAX f32 reference mirroring the PyTorch forward (mask=None path)."""
    B, T, E = x.shape
    H, _, D = params["wq"].shape
    outs = []
    for h in range(H):
        q = x @ params["wq"][h] + params["bq"][h]
        k = x @ params["wk"][h] + params["bk"][h]
        v = x @ params["wv"][h] + params["bv"][h]
        att = (q @ jnp.swapaxes(k, -2, -1)) / (D ** 0.5)
        att = jax.nn.softmax(att, axis=-1)
        outs.append(att @ v)
    cat = jnp.concatenate(outs, axis=-1)
    return cat @ params["wo"] + params["bo"]


if __name__ == "__main__":
    B, T, E, n_heads = 2, 8, 32, 4   # head_dim = 8 (small demo shapes)

    key = jax.random.PRNGKey(0)
    kx, kp = jax.random.split(key)
    x = jax.random.normal(kx, (B, T, E), jnp.float32)
    params = init_params(kp, E, n_heads)

    # One-time weight preparation (transposes/concat/scale-fold/bf16) hoisted
    # out of the forward path.
    prepared = jax.tree_util.tree_map(jax.block_until_ready,
                                      prepare_params(params, n_heads))

    out = multi_head_attention(x, prepared)
    out = jax.block_until_ready(out)

    ref = reference_mha(x, params)
    assert out.shape == (B, T, E)
    # bf16 matmul operands (f32 accumulation) + approx reciprocal in the softmax
    # -> loosened tolerance vs the f32 reference.
    max_diff = float(jnp.max(jnp.abs(out - ref)))
    assert jnp.allclose(out, ref, atol=5e-2, rtol=5e-2), \
        f"mismatch vs reference, max abs diff = {max_diff}"

    print("KERNEL_OK")
</pallas_src>

<mosaic_0001>
module attributes {stable_mosaic.version = 11 : i64} {
  func.func @mha_fused_kernel(%arg0: i32, %arg1: i32, %arg2: memref<1x8x32xbf16, #tpu.memory_space<vmem>>, %arg3: memref<32x96xbf16, #tpu.memory_space<vmem>>, %arg4: memref<1x96xf32, #tpu.memory_space<vmem>>, %arg5: memref<32x32xbf16, #tpu.memory_space<vmem>>, %arg6: memref<1x32xf32, #tpu.memory_space<vmem>>, %arg7: memref<1x8x32xf32, #tpu.memory_space<vmem>>, %arg8: memref<8x96xbf16, #tpu.memory_space<vmem>>, %arg9: memref<8x32xbf16, #tpu.memory_space<vmem>>) attributes {dimension_semantics = [#tpu.dimension_semantics<parallel>, #tpu.dimension_semantics<arbitrary>], iteration_bounds = array<i64: 2, 1>, scalar_prefetch = 0 : i64, scratch_operands = 2 : i64, tpu.core_type = #tpu.core_type<tc>, window_params = [{transform_indices = @transform_0, window_bounds = array<i64: 1, 8, 32>}, {pipeline_mode = #tpu.pipeline_mode<synchronous>, transform_indices = @transform_1, window_bounds = array<i64: 32, 96>}, {pipeline_mode = #tpu.pipeline_mode<synchronous>, transform_indices = @transform_2, window_bounds = array<i64: 1, 96>}, {pipeline_mode = #tpu.pipeline_mode<synchronous>, transform_indices = @transform_3, window_bounds = array<i64: 32, 32>}, {pipeline_mode = #tpu.pipeline_mode<synchronous>, transform_indices = @transform_4, window_bounds = array<i64: 1, 32>}, {transform_indices = @transform_5, window_bounds = array<i64: 1, 8, 32>}]} {
    %c0_i32 = arith.constant 0 : i32
    %0 = arith.cmpi eq, %arg1, %c0_i32 : i32
    %1 = arith.extui %0 : i1 to i32
    %c0_i32_0 = arith.constant 0 : i32
    %2 = arith.cmpi ne, %1, %c0_i32_0 : i32
    scf.if %2 {
      %c0_42 = arith.constant 0 : index
      %c0_43 = arith.constant 0 : index
      %c0_44 = arith.constant 0 : index
      %90 = vector.load %arg2[%c0_42, %c0_43, %c0_44] : memref<1x8x32xbf16, #tpu.memory_space<vmem>>, vector<1x8x32xbf16>
      %91 = vector.shape_cast %90 : vector<1x8x32xbf16> to vector<8x32xbf16>
      %c0_45 = arith.constant 0 : index
      %c0_46 = arith.constant 0 : index
      %92 = vector.load %arg3[%c0_45, %c0_46] : memref<32x96xbf16, #tpu.memory_space<vmem>>, vector<32x96xbf16>
      %cst_47 = arith.constant dense<0.000000e+00> : vector<8x96xf32>
      %93 = tpu.matmul %91, %92, %cst_47 {dimension_numbers = #tpu.dot_dimension_numbers<[1], [0], [0], [1], [0, 0, 1, 1], [], []>} : vector<8x32xbf16>, vector<32x96xbf16>, vector<8x96xf32> -> vector<8x96xf32>
      %c0_48 = arith.constant 0 : index
      %c0_49 = arith.constant 0 : index
      %94 = vector.load %arg4[%c0_48, %c0_49] : memref<1x96xf32, #tpu.memory_space<vmem>>, vector<1x96xf32>
      %95 = vector.broadcast %94 : vector<1x96xf32> to vector<8x96xf32>
      %96 = arith.addf %93, %95 : vector<8x96xf32>
      %97 = arith.truncf %96 : vector<8x96xf32> to vector<8x96xbf16>
      %c0_50 = arith.constant 0 : index
      %c0_51 = arith.constant 0 : index
      %98 = vector.load %arg8[%c0_50, %c0_51] : memref<8x96xbf16, #tpu.memory_space<vmem>>, vector<8x96xbf16>
      tpu.vector_store %arg8[%c0_50, %c0_51], %97 {strides = array<i32>} : memref<8x96xbf16, #tpu.memory_space<vmem>>, vector<8x96xbf16>,
    } else {
    }
    %c8_i32 = arith.constant 8 : i32
    %3 = arith.muli %arg1, %c8_i32 : i32
    %4 = tpu.assume_multiple %3, 8 : i32
    %5 = arith.index_cast %4 : i32 to index
    %c0 = arith.constant 0 : index
    %6 = vector.load %arg8[%5, %c0] : memref<8x96xbf16, #tpu.memory_space<vmem>>, vector<8x8xbf16>
    %c0_1 = arith.constant 0 : index
    %c32 = arith.constant 32 : index
    %7 = vector.load %arg8[%c0_1, %c32] : memref<8x96xbf16, #tpu.memory_space<vmem>>, vector<8x8xbf16>
    %c0_2 = arith.constant 0 : index
    %c64 = arith.constant 64 : index
    %8 = vector.load %arg8[%c0_2, %c64] : memref<8x96xbf16, #tpu.memory_space<vmem>>, vector<8x8xbf16>
    %cst = arith.constant dense<0.000000e+00> : vector<8x8xf32>
    %9 = tpu.matmul %6, %7, %cst {dimension_numbers = #tpu.dot_dimension_numbers<[1], [1], [0], [0], [0, 0, 1, 0], [], []>} : vector<8x8xbf16>, vector<8x8xbf16>, vector<8x8xf32> -> vector<8x8xf32>
    %cst_3 = arith.constant dense<0xFF800000> : vector<8xf32>
    %10 = vector.multi_reduction <maximumf>, %9, %cst_3 [1] : vector<8x8xf32> to vector<8xf32>
    %11 = vector.shape_cast %10 : vector<8xf32> to vector<8x1xf32>
    %12 = vector.broadcast %11 : vector<8x1xf32> to vector<8x8xf32>
    %13 = arith.subf %9, %12 : vector<8x8xf32>
    %14 = math.exp %13 : vector<8x8xf32>
    %cst_4 = arith.constant dense<0.000000e+00> : vector<8xf32>
    %15 = vector.multi_reduction <add>, %14, %cst_4 [1] : vector<8x8xf32> to vector<8xf32>
    %16 = vector.shape_cast %15 : vector<8xf32> to vector<8x1xf32>
    %17 = tpu.reciprocal %16 {approx = true} : vector<8x1xf32> -> vector<8x1xf32>
    %18 = vector.broadcast %17 : vector<8x1xf32> to vector<8x8xf32>
    %19 = arith.mulf %14, %18 : vector<8x8xf32>
    %20 = arith.truncf %19 : vector<8x8xf32> to vector<8x8xbf16>
    %cst_5 = arith.constant dense<0.000000e+00> : vector<8x8xf32>
    %21 = tpu.matmul %20, %8, %cst_5 {dimension_numbers = #tpu.dot_dimension_numbers<[1], [0], [0], [1], [0, 0, 1, 1], [], []>} : vector<8x8xbf16>, vector<8x8xbf16>, vector<8x8xf32> -> vector<8x8xf32>
    %22 = arith.truncf %21 : vector<8x8xf32> to vector<8x8xbf16>
    %c0_6 = arith.constant 0 : index
    %c0_7 = arith.constant 0 : index
    %23 = vector.load %arg9[%c0_6, %c0_7] : memref<8x32xbf16, #tpu.memory_space<vmem>>, vector<8x8xbf16>
    tpu.vector_store %arg9[%c0_6, %c0_7], %22 {strides = array<i32>} : memref<8x32xbf16, #tpu.memory_space<vmem>>, vector<8x8xbf16>,
    %24 = arith.index_cast %4 : i32 to index
    %c8 = arith.constant 8 : index
    %25 = vector.load %arg8[%24, %c8] : memref<8x96xbf16, #tpu.memory_space<vmem>>, vector<8x8xbf16>
    %c0_8 = arith.constant 0 : index
    %c40 = arith.constant 40 : index
    %26 = vector.load %arg8[%c0_8, %c40] : memref<8x96xbf16, #tpu.memory_space<vmem>>, vector<8x8xbf16>
    %c0_9 = arith.constant 0 : index
    %c72 = arith.constant 72 : index
    %27 = vector.load %arg8[%c0_9, %c72] : memref<8x96xbf16, #tpu.memory_space<vmem>>, vector<8x8xbf16>
    %cst_10 = arith.constant dense<0.000000e+00> : vector<8x8xf32>
    %28 = tpu.matmul %25, %26, %cst_10 {dimension_numbers = #tpu.dot_dimension_numbers<[1], [1], [0], [0], [0, 0, 1, 0], [], []>} : vector<8x8xbf16>, vector<8x8xbf16>, vector<8x8xf32> -> vector<8x8xf32>
    %cst_11 = arith.constant dense<0xFF800000> : vector<8xf32>
    %29 = vector.multi_reduction <maximumf>, %28, %cst_11 [1] : vector<8x8xf32> to vector<8xf32>
    %30 = vector.shape_cast %29 : vector<8xf32> to vector<8x1xf32>
    %31 = vector.broadcast %30 : vector<8x1xf32> to vector<8x8xf32>
    %32 = arith.subf %28, %31 : vector<8x8xf32>
    %33 = math.exp %32 : vector<8x8xf32>
    %cst_12 = arith.constant dense<0.000000e+00> : vector<8xf32>
    %34 = vector.multi_reduction <add>, %33, %cst_12 [1] : vector<8x8xf32> to vector<8xf32>
    %35 = vector.shape_cast %34 : vector<8xf32> to vector<8x1xf32>
    %36 = tpu.reciprocal %35 {approx = true} : vector<8x1xf32> -> vector<8x1xf32>
    %37 = vector.broadcast %36 : vector<8x1xf32> to vector<8x8xf32>
    %38 = arith.mulf %33, %37 : vector<8x8xf32>
    %39 = arith.truncf %38 : vector<8x8xf32> to vector<8x8xbf16>
    %cst_13 = arith.constant dense<0.000000e+00> : vector<8x8xf32>
    %40 = tpu.matmul %39, %27, %cst_13 {dimension_numbers = #tpu.dot_dimension_numbers<[1], [0], [0], [1], [0, 0, 1, 1], [], []>} : vector<8x8xbf16>, vector<8x8xbf16>, vector<8x8xf32> -> vector<8x8xf32>
    %41 = arith.truncf %40 : vector<8x8xf32> to vector<8x8xbf16>
    %c0_14 = arith.constant 0 : index
    %c8_15 = arith.constant 8 : index
    %42 = vector.load %arg9[%c0_14, %c8_15] : memref<8x32xbf16, #tpu.memory_space<vmem>>, vector<8x8xbf16>
    tpu.vector_store %arg9[%c0_14, %c8_15], %41 {strides = array<i32>} : memref<8x32xbf16, #tpu.memory_space<vmem>>, vector<8x8xbf16>,
    %43 = arith.index_cast %4 : i32 to index
    %c16 = arith.constant 16 : index
    %44 = vector.load %arg8[%43, %c16] : memref<8x96xbf16, #tpu.memory_space<vmem>>, vector<8x8xbf16>
    %c0_16 = arith.constant 0 : index
    %c48 = arith.constant 48 : index
    %45 = vector.load %arg8[%c0_16, %c48] : memref<8x96xbf16, #tpu.memory_space<vmem>>, vector<8x8xbf16>
    %c0_17 = arith.constant 0 : index
    %c80 = arith.constant 80 : index
    %46 = vector.load %arg8[%c0_17, %c80] : memref<8x96xbf16, #tpu.memory_space<vmem>>, vector<8x8xbf16>
    %cst_18 = arith.constant dense<0.000000e+00> : vector<8x8xf32>
    %47 = tpu.matmul %44, %45, %cst_18 {dimension_numbers = #tpu.dot_dimension_numbers<[1], [1], [0], [0], [0, 0, 1, 0], [], []>} : vector<8x8xbf16>, vector<8x8xbf16>, vector<8x8xf32> -> vector<8x8xf32>
    %cst_19 = arith.constant dense<0xFF800000> : vector<8xf32>
    %48 = vector.multi_reduction <maximumf>, %47, %cst_19 [1] : vector<8x8xf32> to vector<8xf32>
    %49 = vector.shape_cast %48 : vector<8xf32> to vector<8x1xf32>
    %50 = vector.broadcast %49 : vector<8x1xf32> to vector<8x8xf32>
    %51 = arith.subf %47, %50 : vector<8x8xf32>
    %52 = math.exp %51 : vector<8x8xf32>
    %cst_20 = arith.constant dense<0.000000e+00> : vector<8xf32>
    %53 = vector.multi_reduction <add>, %52, %cst_20 [1] : vector<8x8xf32> to vector<8xf32>
    %54 = vector.shape_cast %53 : vector<8xf32> to vector<8x1xf32>
    %55 = tpu.reciprocal %54 {approx = true} : vector<8x1xf32> -> vector<8x1xf32>
    %56 = vector.broadcast %55 : vector<8x1xf32> to vector<8x8xf32>
    %57 = arith.mulf %52, %56 : vector<8x8xf32>
    %58 = arith.truncf %57 : vector<8x8xf32> to vector<8x8xbf16>
    %cst_21 = arith.constant dense<0.000000e+00> : vector<8x8xf32>
    %59 = tpu.matmul %58, %46, %cst_21 {dimension_numbers = #tpu.dot_dimension_numbers<[1], [0], [0], [1], [0, 0, 1, 1], [], []>} : vector<8x8xbf16>, vector<8x8xbf16>, vector<8x8xf32> -> vector<8x8xf32>
    %60 = arith.truncf %59 : vector<8x8xf32> to vector<8x8xbf16>
    %c0_22 = arith.constant 0 : index
    %c16_23 = arith.constant 16 : index
    %61 = vector.load %arg9[%c0_22, %c16_23] : memref<8x32xbf16, #tpu.memory_space<vmem>>, vector<8x8xbf16>
    tpu.vector_store %arg9[%c0_22, %c16_23], %60 {strides = array<i32>} : memref<8x32xbf16, #tpu.memory_space<vmem>>, vector<8x8xbf16>,
    %62 = arith.index_cast %4 : i32 to index
    %c24 = arith.constant 24 : index
    %63 = vector.load %arg8[%62, %c24] : memref<8x96xbf16, #tpu.memory_space<vmem>>, vector<8x8xbf16>
    %c0_24 = arith.constant 0 : index
    %c56 = arith.constant 56 : index
    %64 = vector.load %arg8[%c0_24, %c56] : memref<8x96xbf16, #tpu.memory_space<vmem>>, vector<8x8xbf16>
    %c0_25 = arith.constant 0 : index
    %c88 = arith.constant 88 : index
    %65 = vector.load %arg8[%c0_25, %c88] : memref<8x96xbf16, #tpu.memory_space<vmem>>, vector<8x8xbf16>
    %cst_26 = arith.constant dense<0.000000e+00> : vector<8x8xf32>
    %66 = tpu.matmul %63, %64, %cst_26 {dimension_numbers = #tpu.dot_dimension_numbers<[1], [1], [0], [0], [0, 0, 1, 0], [], []>} : vector<8x8xbf16>, vector<8x8xbf16>, vector<8x8xf32> -> vector<8x8xf32>
    %cst_27 = arith.constant dense<0xFF800000> : vector<8xf32>
    %67 = vector.multi_reduction <maximumf>, %66, %cst_27 [1] : vector<8x8xf32> to vector<8xf32>
    %68 = vector.shape_cast %67 : vector<8xf32> to vector<8x1xf32>
    %69 = vector.broadcast %68 : vector<8x1xf32> to vector<8x8xf32>
    %70 = arith.subf %66, %69 : vector<8x8xf32>
    %71 = math.exp %70 : vector<8x8xf32>
    %cst_28 = arith.constant dense<0.000000e+00> : vector<8xf32>
    %72 = vector.multi_reduction <add>, %71, %cst_28 [1] : vector<8x8xf32> to vector<8xf32>
    %73 = vector.shape_cast %72 : vector<8xf32> to vector<8x1xf32>
    %74 = tpu.reciprocal %73 {approx = true} : vector<8x1xf32> -> vector<8x1xf32>
    %75 = vector.broadcast %74 : vector<8x1xf32> to vector<8x8xf32>
    %76 = arith.mulf %71, %75 : vector<8x8xf32>
    %77 = arith.truncf %76 : vector<8x8xf32> to vector<8x8xbf16>
    %cst_29 = arith.constant dense<0.000000e+00> : vector<8x8xf32>
    %78 = tpu.matmul %77, %65, %cst_29 {dimension_numbers = #tpu.dot_dimension_numbers<[1], [0], [0], [1], [0, 0, 1, 1], [], []>} : vector<8x8xbf16>, vector<8x8xbf16>, vector<8x8xf32> -> vector<8x8xf32>
    %79 = arith.truncf %78 : vector<8x8xf32> to vector<8x8xbf16>
    %c0_30 = arith.constant 0 : index
    %c24_31 = arith.constant 24 : index
    %80 = vector.load %arg9[%c0_30, %c24_31] : memref<8x32xbf16, #tpu.memory_space<vmem>>, vector<8x8xbf16>
    tpu.vector_store %arg9[%c0_30, %c24_31], %79 {strides = array<i32>} : memref<8x32xbf16, #tpu.memory_space<vmem>>, vector<8x8xbf16>,
    %c0_32 = arith.constant 0 : index
    %c0_33 = arith.constant 0 : index
    %81 = vector.load %arg9[%c0_32, %c0_33] : memref<8x32xbf16, #tpu.memory_space<vmem>>, vector<8x32xbf16>
    %c0_34 = arith.constant 0 : index
    %c0_35 = arith.constant 0 : index
    %82 = vector.load %arg5[%c0_34, %c0_35] : memref<32x32xbf16, #tpu.memory_space<vmem>>, vector<32x32xbf16>
    %cst_36 = arith.constant dense<0.000000e+00> : vector<8x32xf32>
    %83 = tpu.matmul %81, %82, %cst_36 {dimension_numbers = #tpu.dot_dimension_numbers<[1], [0], [0], [1], [0, 0, 1, 1], [], []>} : vector<8x32xbf16>, vector<32x32xbf16>, vector<8x32xf32> -> vector<8x32xf32>
    %c0_37 = arith.constant 0 : index
    %c0_38 = arith.constant 0 : index
    %84 = vector.load %arg6[%c0_37, %c0_38] : memref<1x32xf32, #tpu.memory_space<vmem>>, vector<1x32xf32>
    %85 = vector.broadcast %84 : vector<1x32xf32> to vector<8x32xf32>
    %86 = arith.addf %83, %85 : vector<8x32xf32>
    %c0_39 = arith.constant 0 : index
    %c0_40 = arith.constant 0 : index
    %c0_41 = arith.constant 0 : index
    %87 = vector.load %arg7[%c0_39, %c0_40, %c0_41] : memref<1x8x32xf32, #tpu.memory_space<vmem>>, vector<1x8x32xf32>
    %88 = vector.shape_cast %87 : vector<1x8x32xf32> to vector<8x32xf32>
    %89 = vector.shape_cast %86 : vector<8x32xf32> to vector<1x8x32xf32>
    tpu.vector_store %arg7[%c0_39, %c0_40, %c0_41], %89 {strides = array<i32>} : memref<1x8x32xf32, #tpu.memory_space<vmem>>, vector<1x8x32xf32>,
    return
  }
  func.func @transform_0(%arg0: i32, %arg1: i32) -> (i32, i32, i32) {
    %c0_i32 = arith.constant 0 : i32
    %c0_i32_0 = arith.constant 0 : i32
    %c0_i32_1 = arith.constant 0 : i32
    return %arg0, %c0_i32, %c0_i32_0 : i32, i32, i32
  }
  func.func @transform_1(%arg0: i32, %arg1: i32) -> (i32, i32) {
    %c0_i32 = arith.constant 0 : i32
    %c0_i32_0 = arith.constant 0 : i32
    %c0_i32_1 = arith.constant 0 : i32
    return %c0_i32, %c0_i32_0 : i32, i32
  }
  func.func @transform_2(%arg0: i32, %arg1: i32) -> (i32, i32) {
    %c0_i32 = arith.constant 0 : i32
    %c0_i32_0 = arith.constant 0 : i32
    %c0_i32_1 = arith.constant 0 : i32
    return %c0_i32, %c0_i32_0 : i32, i32
  }
  func.func @transform_3(%arg0: i32, %arg1: i32) -> (i32, i32) {
    %c0_i32 = arith.constant 0 : i32
    %c0_i32_0 = arith.constant 0 : i32
    %c0_i32_1 = arith.constant 0 : i32
    return %c0_i32, %c0_i32_0 : i32, i32
  }
  func.func @transform_4(%arg0: i32, %arg1: i32) -> (i32, i32) {
    %c0_i32 = arith.constant 0 : i32
    %c0_i32_0 = arith.constant 0 : i32
    %c0_i32_1 = arith.constant 0 : i32
    return %c0_i32, %c0_i32_0 : i32, i32
  }
  func.func @transform_5(%arg0: i32, %arg1: i32) -> (i32, i32, i32) {
    %c0_i32 = arith.constant 0 : i32
    %c0_i32_0 = arith.constant 0 : i32
    return %arg0, %arg1, %c0_i32 : i32, i32, i32
  }
}

module attributes {stable_mosaic.version = 11 : i64} {
  func.func @mha_fused_kernel(%arg0: i32, %arg1: i32, %arg2: memref<1x8x32xbf16, #tpu.memory_space<vmem>>, %arg3: memref<32x96xbf16, #tpu.memory_space<vmem>>, %arg4: memref<1x96xf32, #tpu.memory_space<vmem>>, %arg5: memref<32x32xbf16, #tpu.memory_space<vmem>>, %arg6: memref<1x32xf32, #tpu.memory_space<vmem>>, %arg7: memref<1x8x32xf32, #tpu.memory_space<vmem>>, %arg8: memref<8x96xbf16, #tpu.memory_space<vmem>>, %arg9: memref<8x32xbf16, #tpu.memory_space<vmem>>) attributes {dimension_semantics = [#tpu.dimension_semantics<parallel>, #tpu.dimension_semantics<arbitrary>], iteration_bounds = array<i64: 2, 1>, scalar_prefetch = 0 : i64, scratch_operands = 2 : i64, tpu.core_type = #tpu.core_type<tc>, window_params = [{transform_indices = @transform_0, window_bounds = array<i64: 1, 8, 32>}, {pipeline_mode = #tpu.pipeline_mode<synchronous>, transform_indices = @transform_1, window_bounds = array<i64: 32, 96>}, {pipeline_mode = #tpu.pipeline_mode<synchronous>, transform_indices = @transform_2, window_bounds = array<i64: 1, 96>}, {pipeline_mode = #tpu.pipeline_mode<synchronous>, transform_indices = @transform_3, window_bounds = array<i64: 32, 32>}, {pipeline_mode = #tpu.pipeline_mode<synchronous>, transform_indices = @transform_4, window_bounds = array<i64: 1, 32>}, {transform_indices = @transform_5, window_bounds = array<i64: 1, 8, 32>}]} {
    %c0_i32 = arith.constant 0 : i32
    %0 = arith.cmpi eq, %arg1, %c0_i32 : i32
    %1 = arith.extui %0 : i1 to i32
    %c0_i32_0 = arith.constant 0 : i32
    %2 = arith.cmpi ne, %1, %c0_i32_0 : i32
    scf.if %2 {
      %c0_42 = arith.constant 0 : index
      %c0_43 = arith.constant 0 : index
      %c0_44 = arith.constant 0 : index
      %90 = vector.load %arg2[%c0_42, %c0_43, %c0_44] : memref<1x8x32xbf16, #tpu.memory_space<vmem>>, vector<1x8x32xbf16>
      %91 = vector.shape_cast %90 : vector<1x8x32xbf16> to vector<8x32xbf16>
      %c0_45 = arith.constant 0 : index
      %c0_46 = arith.constant 0 : index
      %92 = vector.load %arg3[%c0_45, %c0_46] : memref<32x96xbf16, #tpu.memory_space<vmem>>, vector<32x96xbf16>
      %cst_47 = arith.constant dense<0.000000e+00> : vector<8x96xf32>
      %93 = tpu.matmul %91, %92, %cst_47 {dimension_numbers = #tpu.dot_dimension_numbers<[1], [0], [0], [1], [0, 0, 1, 1], [], []>} : vector<8x32xbf16>, vector<32x96xbf16>, vector<8x96xf32> -> vector<8x96xf32>
      %c0_48 = arith.constant 0 : index
      %c0_49 = arith.constant 0 : index
      %94 = vector.load %arg4[%c0_48, %c0_49] : memref<1x96xf32, #tpu.memory_space<vmem>>, vector<1x96xf32>
      %95 = vector.broadcast %94 : vector<1x96xf32> to vector<8x96xf32>
      %96 = arith.addf %93, %95 : vector<8x96xf32>
      %97 = arith.truncf %96 : vector<8x96xf32> to vector<8x96xbf16>
      %c0_50 = arith.constant 0 : index
      %c0_51 = arith.constant 0 : index
      %98 = vector.load %arg8[%c0_50, %c0_51] : memref<8x96xbf16, #tpu.memory_space<vmem>>, vector<8x96xbf16>
      tpu.vector_store %arg8[%c0_50, %c0_51], %97 {strides = array<i32>} : memref<8x96xbf16, #tpu.memory_space<vmem>>, vector<8x96xbf16>,
    } else {
    }
    %c8_i32 = arith.constant 8 : i32
    %3 = arith.muli %arg1, %c8_i32 : i32
    %4 = tpu.assume_multiple %3, 8 : i32
    %5 = arith.index_cast %4 : i32 to index
    %c0 = arith.constant 0 : index
    %6 = vector.load %arg8[%5, %c0] : memref<8x96xbf16, #tpu.memory_space<vmem>>, vector<8x8xbf16>
    %c0_1 = arith.constant 0 : index
    %c32 = arith.constant 32 : index
    %7 = vector.load %arg8[%c0_1, %c32] : memref<8x96xbf16, #tpu.memory_space<vmem>>, vector<8x8xbf16>
    %c0_2 = arith.constant 0 : index
    %c64 = arith.constant 64 : index
    %8 = vector.load %arg8[%c0_2, %c64] : memref<8x96xbf16, #tpu.memory_space<vmem>>, vector<8x8xbf16>
    %cst = arith.constant dense<0.000000e+00> : vector<8x8xf32>
    %9 = tpu.matmul %6, %7, %cst {dimension_numbers = #tpu.dot_dimension_numbers<[1], [1], [0], [0], [0, 0, 1, 0], [], []>} : vector<8x8xbf16>, vector<8x8xbf16>, vector<8x8xf32> -> vector<8x8xf32>
    %cst_3 = arith.constant dense<0xFF800000> : vector<8xf32>
    %10 = vector.multi_reduction <maximumf>, %9, %cst_3 [1] : vector<8x8xf32> to vector<8xf32>
    %11 = vector.shape_cast %10 : vector<8xf32> to vector<8x1xf32>
    %12 = vector.broadcast %11 : vector<8x1xf32> to vector<8x8xf32>
    %13 = arith.subf %9, %12 : vector<8x8xf32>
    %14 = math.exp %13 : vector<8x8xf32>
    %cst_4 = arith.constant dense<0.000000e+00> : vector<8xf32>
    %15 = vector.multi_reduction <add>, %14, %cst_4 [1] : vector<8x8xf32> to vector<8xf32>
    %16 = vector.shape_cast %15 : vector<8xf32> to vector<8x1xf32>
    %17 = tpu.reciprocal %16 {approx = true} : vector<8x1xf32> -> vector<8x1xf32>
    %18 = vector.broadcast %17 : vector<8x1xf32> to vector<8x8xf32>
    %19 = arith.mulf %14, %18 : vector<8x8xf32>
    %20 = arith.truncf %19 : vector<8x8xf32> to vector<8x8xbf16>
    %cst_5 = arith.constant dense<0.000000e+00> : vector<8x8xf32>
    %21 = tpu.matmul %20, %8, %cst_5 {dimension_numbers = #tpu.dot_dimension_numbers<[1], [0], [0], [1], [0, 0, 1, 1], [], []>} : vector<8x8xbf16>, vector<8x8xbf16>, vector<8x8xf32> -> vector<8x8xf32>
    %22 = arith.truncf %21 : vector<8x8xf32> to vector<8x8xbf16>
    %c0_6 = arith.constant 0 : index
    %c0_7 = arith.constant 0 : index
    %23 = vector.load %arg9[%c0_6, %c0_7] : memref<8x32xbf16, #tpu.memory_space<vmem>>, vector<8x8xbf16>
    tpu.vector_store %arg9[%c0_6, %c0_7], %22 {strides = array<i32>} : memref<8x32xbf16, #tpu.memory_space<vmem>>, vector<8x8xbf16>,
    %24 = arith.index_cast %4 : i32 to index
    %c8 = arith.constant 8 : index
    %25 = vector.load %arg8[%24, %c8] : memref<8x96xbf16, #tpu.memory_space<vmem>>, vector<8x8xbf16>
    %c0_8 = arith.constant 0 : index
    %c40 = arith.constant 40 : index
    %26 = vector.load %arg8[%c0_8, %c40] : memref<8x96xbf16, #tpu.memory_space<vmem>>, vector<8x8xbf16>
    %c0_9 = arith.constant 0 : index
    %c72 = arith.constant 72 : index
    %27 = vector.load %arg8[%c0_9, %c72] : memref<8x96xbf16, #tpu.memory_space<vmem>>, vector<8x8xbf16>
    %cst_10 = arith.constant dense<0.000000e+00> : vector<8x8xf32>
    %28 = tpu.matmul %25, %26, %cst_10 {dimension_numbers = #tpu.dot_dimension_numbers<[1], [1], [0], [0], [0, 0, 1, 0], [], []>} : vector<8x8xbf16>, vector<8x8xbf16>, vector<8x8xf32> -> vector<8x8xf32>
    %cst_11 = arith.constant dense<0xFF800000> : vector<8xf32>
    %29 = vector.multi_reduction <maximumf>, %28, %cst_11 [1] : vector<8x8xf32> to vector<8xf32>
    %30 = vector.shape_cast %29 : vector<8xf32> to vector<8x1xf32>
    %31 = vector.broadcast %30 : vector<8x1xf32> to vector<8x8xf32>
    %32 = arith.subf %28, %31 : vector<8x8xf32>
    %33 = math.exp %32 : vector<8x8xf32>
    %cst_12 = arith.constant dense<0.000000e+00> : vector<8xf32>
    %34 = vector.multi_reduction <add>, %33, %cst_12 [1] : vector<8x8xf32> to vector<8xf32>
    %35 = vector.shape_cast %34 : vector<8xf32> to vector<8x1xf32>
    %36 = tpu.reciprocal %35 {approx = true} : vector<8x1xf32> -> vector<8x1xf32>
    %37 = vector.broadcast %36 : vector<8x1xf32> to vector<8x8xf32>
    %38 = arith.mulf %33, %37 : vector<8x8xf32>
    %39 = arith.truncf %38 : vector<8x8xf32> to vector<8x8xbf16>
    %cst_13 = arith.constant dense<0.000000e+00> : vector<8x8xf32>
    %40 = tpu.matmul %39, %27, %cst_13 {dimension_numbers = #tpu.dot_dimension_numbers<[1], [0], [0], [1], [0, 0, 1, 1], [], []>} : vector<8x8xbf16>, vector<8x8xbf16>, vector<8x8xf32> -> vector<8x8xf32>
    %41 = arith.truncf %40 : vector<8x8xf32> to vector<8x8xbf16>
    %c0_14 = arith.constant 0 : index
    %c8_15 = arith.constant 8 : index
    %42 = vector.load %arg9[%c0_14, %c8_15] : memref<8x32xbf16, #tpu.memory_space<vmem>>, vector<8x8xbf16>
    tpu.vector_store %arg9[%c0_14, %c8_15], %41 {strides = array<i32>} : memref<8x32xbf16, #tpu.memory_space<vmem>>, vector<8x8xbf16>,
    %43 = arith.index_cast %4 : i32 to index
    %c16 = arith.constant 16 : index
    %44 = vector.load %arg8[%43, %c16] : memref<8x96xbf16, #tpu.memory_space<vmem>>, vector<8x8xbf16>
    %c0_16 = arith.constant 0 : index
    %c48 = arith.constant 48 : index
    %45 = vector.load %arg8[%c0_16, %c48] : memref<8x96xbf16, #tpu.memory_space<vmem>>, vector<8x8xbf16>
    %c0_17 = arith.constant 0 : index
    %c80 = arith.constant 80 : index
    %46 = vector.load %arg8[%c0_17, %c80] : memref<8x96xbf16, #tpu.memory_space<vmem>>, vector<8x8xbf16>
    %cst_18 = arith.constant dense<0.000000e+00> : vector<8x8xf32>
    %47 = tpu.matmul %44, %45, %cst_18 {dimension_numbers = #tpu.dot_dimension_numbers<[1], [1], [0], [0], [0, 0, 1, 0], [], []>} : vector<8x8xbf16>, vector<8x8xbf16>, vector<8x8xf32> -> vector<8x8xf32>
    %cst_19 = arith.constant dense<0xFF800000> : vector<8xf32>
    %48 = vector.multi_reduction <maximumf>, %47, %cst_19 [1] : vector<8x8xf32> to vector<8xf32>
    %49 = vector.shape_cast %48 : vector<8xf32> to vector<8x1xf32>
    %50 = vector.broadcast %49 : vector<8x1xf32> to vector<8x8xf32>
    %51 = arith.subf %47, %50 : vector<8x8xf32>
    %52 = math.exp %51 : vector<8x8xf32>
    %cst_20 = arith.constant dense<0.000000e+00> : vector<8xf32>
    %53 = vector.multi_reduction <add>, %52, %cst_20 [1] : vector<8x8xf32> to vector<8xf32>
    %54 = vector.shape_cast %53 : vector<8xf32> to vector<8x1xf32>
    %55 = tpu.reciprocal %54 {approx = true} : vector<8x1xf32> -> vector<8x1xf32>
    %56 = vector.broadcast %55 : vector<8x1xf32> to vector<8x8xf32>
    %57 = arith.mulf %52, %56 : vector<8x8xf32>
    %58 = arith.truncf %57 : vector<8x8xf32> to vector<8x8xbf16>
    %cst_21 = arith.constant dense<0.000000e+00> : vector<8x8xf32>
    %59 = tpu.matmul %58, %46, %cst_21 {dimension_numbers = #tpu.dot_dimension_numbers<[1], [0], [0], [1], [0, 0, 1, 1], [], []>} : vector<8x8xbf16>, vector<8x8xbf16>, vector<8x8xf32> -> vector<8x8xf32>
    %60 = arith.truncf %59 : vector<8x8xf32> to vector<8x8xbf16>
    %c0_22 = arith.constant 0 : index
    %c16_23 = arith.constant 16 : index
    %61 = vector.load %arg9[%c0_22, %c16_23] : memref<8x32xbf16, #tpu.memory_space<vmem>>, vector<8x8xbf16>
    tpu.vector_store %arg9[%c0_22, %c16_23], %60 {strides = array<i32>} : memref<8x32xbf16, #tpu.memory_space<vmem>>, vector<8x8xbf16>,
    %62 = arith.index_cast %4 : i32 to index
    %c24 = arith.constant 24 : index
    %63 = vector.load %arg8[%62, %c24] : memref<8x96xbf16, #tpu.memory_space<vmem>>, vector<8x8xbf16>
    %c0_24 = arith.constant 0 : index
    %c56 = arith.constant 56 : index
    %64 = vector.load %arg8[%c0_24, %c56] : memref<8x96xbf16, #tpu.memory_space<vmem>>, vector<8x8xbf16>
    %c0_25 = arith.constant 0 : index
    %c88 = arith.constant 88 : index
    %65 = vector.load %arg8[%c0_25, %c88] : memref<8x96xbf16, #tpu.memory_space<vmem>>, vector<8x8xbf16>
    %cst_26 = arith.constant dense<0.000000e+00> : vector<8x8xf32>
    %66 = tpu.matmul %63, %64, %cst_26 {dimension_numbers = #tpu.dot_dimension_numbers<[1], [1], [0], [0], [0, 0, 1, 0], [], []>} : vector<8x8xbf16>, vector<8x8xbf16>, vector<8x8xf32> -> vector<8x8xf32>
    %cst_27 = arith.constant dense<0xFF800000> : vector<8xf32>
    %67 = vector.multi_reduction <maximumf>, %66, %cst_27 [1] : vector<8x8xf32> to vector<8xf32>
    %68 = vector.shape_cast %67 : vector<8xf32> to vector<8x1xf32>
    %69 = vector.broadcast %68 : vector<8x1xf32> to vector<8x8xf32>
    %70 = arith.subf %66, %69 : vector<8x8xf32>
    %71 = math.exp %70 : vector<8x8xf32>
    %cst_28 = arith.constant dense<0.000000e+00> : vector<8xf32>
    %72 = vector.multi_reduction <add>, %71, %cst_28 [1] : vector<8x8xf32> to vector<8xf32>
    %73 = vector.shape_cast %72 : vector<8xf32> to vector<8x1xf32>
    %74 = tpu.reciprocal %73 {approx = true} : vector<8x1xf32> -> vector<8x1xf32>
    %75 = vector.broadcast %74 : vector<8x1xf32> to vector<8x8xf32>
    %76 = arith.mulf %71, %75 : vector<8x8xf32>
    %77 = arith.truncf %76 : vector<8x8xf32> to vector<8x8xbf16>
    %cst_29 = arith.constant dense<0.000000e+00> : vector<8x8xf32>
    %78 = tpu.matmul %77, %65, %cst_29 {dimension_numbers = #tpu.dot_dimension_numbers<[1], [0], [0], [1], [0, 0, 1, 1], [], []>} : vector<8x8xbf16>, vector<8x8xbf16>, vector<8x8xf32> -> vector<8x8xf32>
    %79 = arith.truncf %78 : vector<8x8xf32> to vector<8x8xbf16>
    %c0_30 = arith.constant 0 : index
    %c24_31 = arith.constant 24 : index
    %80 = vector.load %arg9[%c0_30, %c24_31] : memref<8x32xbf16, #tpu.memory_space<vmem>>, vector<8x8xbf16>
    tpu.vector_store %arg9[%c0_30, %c24_31], %79 {strides = array<i32>} : memref<8x32xbf16, #tpu.memory_space<vmem>>, vector<8x8xbf16>,
    %c0_32 = arith.constant 0 : index
    %c0_33 = arith.constant 0 : index
    %81 = vector.load %arg9[%c0_32, %c0_33] : memref<8x32xbf16, #tpu.memory_space<vmem>>, vector<8x32xbf16>
    %c0_34 = arith.constant 0 : index
    %c0_35 = arith.constant 0 : index
    %82 = vector.load %arg5[%c0_34, %c0_35] : memref<32x32xbf16, #tpu.memory_space<vmem>>, vector<32x32xbf16>
    %cst_36 = arith.constant dense<0.000000e+00> : vector<8x32xf32>
    %83 = tpu.matmul %81, %82, %cst_36 {dimension_numbers = #tpu.dot_dimension_numbers<[1], [0], [0], [1], [0, 0, 1, 1], [], []>} : vector<8x32xbf16>, vector<32x32xbf16>, vector<8x32xf32> -> vector<8x32xf32>
    %c0_37 = arith.constant 0 : index
    %c0_38 = arith.constant 0 : index
    %84 = vector.load %arg6[%c0_37, %c0_38] : memref<1x32xf32, #tpu.memory_space<vmem>>, vector<1x32xf32>
    %85 = vector.broadcast %84 : vector<1x32xf32> to vector<8x32xf32>
    %86 = arith.addf %83, %85 : vector<8x32xf32>
    %c0_39 = arith.constant 0 : index
    %c0_40 = arith.constant 0 : index
    %c0_41 = arith.constant 0 : index
    %87 = vector.load %arg7[%c0_39, %c0_40, %c0_41] : memref<1x8x32xf32, #tpu.memory_space<vmem>>, vector<1x8x32xf32>
    %88 = vector.shape_cast %87 : vector<1x8x32xf32> to vector<8x32xf32>
    %89 = vector.shape_cast %86 : vector<8x32xf32> to vector<1x8x32xf32>
    tpu.vector_store %arg7[%c0_39, %c0_40, %c0_41], %89 {strides = array<i32>} : memref<1x8x32xf32, #tpu.memory_space<vmem>>, vector<1x8x32xf32>,
    return
  }
  func.func @transform_0(%arg0: i32, %arg1: i32) -> (i32, i32, i32) {
    %c0_i32 = arith.constant 0 : i32
    %c0_i32_0 = arith.constant 0 : i32
    %c0_i32_1 = arith.constant 0 : i32
    return %arg0, %c0_i32, %c0_i32_0 : i32, i32, i32
  }
  func.func @transform_1(%arg0: i32, %arg1: i32) -> (i32, i32) {
    %c0_i32 = arith.constant 0 : i32
    %c0_i32_0 = arith.constant 0 : i32
    %c0_i32_1 = arith.constant 0 : i32
    return %c0_i32, %c0_i32_0 : i32, i32
  }
  func.func @transform_2(%arg0: i32, %arg1: i32) -> (i32, i32) {
    %c0_i32 = arith.constant 0 : i32
    %c0_i32_0 = arith.constant 0 : i32
    %c0_i32_1 = arith.constant 0 : i32
    return %c0_i32, %c0_i32_0 : i32, i32
  }
  func.func @transform_3(%arg0: i32, %arg1: i32) -> (i32, i32) {
    %c0_i32 = arith.constant 0 : i32
    %c0_i32_0 = arith.constant 0 : i32
    %c0_i32_1 = arith.constant 0 : i32
    return %c0_i32, %c0_i32_0 : i32, i32
  }
  func.func @transform_4(%arg0: i32, %arg1: i32) -> (i32, i32) {
    %c0_i32 = arith.constant 0 : i32
    %c0_i32_0 = arith.constant 0 : i32
    %c0_i32_1 = arith.constant 0 : i32
    return %c0_i32, %c0_i32_0 : i32, i32
  }
  func.func @transform_5(%arg0: i32, %arg1: i32) -> (i32, i32, i32) {
    %c0_i32 = arith.constant 0 : i32
    %c0_i32_0 = arith.constant 0 : i32
    return %arg0, %arg1, %c0_i32 : i32, i32, i32
  }
}

</mosaic_0001>

<llo_original>
// kernel: tpu_custom_call.1
$region0: #{tpu_custom_call.1}
  #allocation0 [shape = 'u32[]', space=smem, size = 0x4, offset = 0x4, fixed_abs, tag = 'smem constant byte address 0x4 - core index']
  #allocation1 [shape = 'u32[144,128]{1,0:T(1,128)}', space=vmem, size = 0x12000, scoped, tag = 'internal scratch']
  #allocation2 [shape = 'bf16[8,96]{1,0:T(8,128)(2,1)}', space=vmem, size = 0x800, scoped, tag = 'scratch operand']
  #allocation3 [shape = 'bf16[8,32]{1,0:T(8,128)(2,1)}', space=vmem, size = 0x800, scoped, tag = 'scratch operand']
  %s0 = inlined_call_operand.hbm [shape: bf16[2,8,32], index: 0, kind: input, shape index: {}]
  %s1 = inlined_call_operand.hbm [shape: bf16[32,96], index: 1, kind: input, shape index: {}]
  %s2 = inlined_call_operand.vmem [shape: f32[1,96], index: 2, kind: input, shape index: {}]
  %s3 = inlined_call_operand.hbm [shape: bf16[32,32], index: 3, kind: input, shape index: {}]
  %s4 = inlined_call_operand.vmem [shape: f32[1,32], index: 4, kind: input, shape index: {}]
  %s5 = inlined_call_operand.hbm [shape: f32[2,8,32], index: 5, kind: output, shape index: {}]
  %s6 = sld [smem:[#allocation0]]
  $region69: #{tpu_custom_call.1} parent=0
    _
  %s8 = ssub.s32 1, %s6
  %s9 = scalar_select 0, %s8, %s6
  $region1: #{tpu_custom_call.1} parent=0
    #allocation4 [shape = 'u8[4096]{0}', space=vmem, size = 0x1000, scoped, tag = 'input window, operand 0']
    #allocation5 [shape = 's32[2]{0}', space=sflag, size = 0x8, scoped, tag = 'scoped memory for tpu_custom_call.1']
    #allocation6 [shape = 's32[2]{0}', space=sflag, size = 0x8, scoped, tag = 'scoped memory for tpu_custom_call.1']
    #allocation7 [shape = 'u8[8192]{0}', space=vmem, size = 0x2000, scoped, tag = 'input window, operand 1, single buffered']
    #allocation8 [shape = 's32[1]{0}', space=sflag, size = 0x4, scoped, tag = 'scoped memory for tpu_custom_call.1']
    #allocation9 [shape = 'u8[8192]{0}', space=vmem, size = 0x2000, scoped, tag = 'input window, operand 3, single buffered']
    #allocation10 [shape = 'u8[8192]{0}', space=vmem, size = 0x2000, scoped, tag = 'output window, operand 0']
    %10 = vsyncpa [#allocation5], 0
    %s11 = scalar_lea.sflag [#allocation5], 1
    %12 = vsyncpa %s11, 0
    %13 = vsyncpa [#allocation8], 0
    %14 = vsyncpa [#allocation6], 0
    %s15 = scalar_lea.sflag [#allocation6], 1
    %16 = vsyncpa %s15, 0
    loop: start=0, step=1, limit=4
    $region2: #{tpu_custom_call.1} parent=1 // loop_pre_header
      _
    $region3: #{tpu_custom_call.1} parent=1 // loop_header
      %s18 = sphi 0, %s22
      %p19 = scmp.ge.s32.totalorder %s18, 4
      %s25 = sphi 0, %s37
      %s26 = sphi 0, %s33
      %s27 = sphi 0, %s25
      %s28 = sphi 0, %s26
      %s29 = sphi 0, %s27
      %s30 = sphi 0, %s28
      %s40 = sphi 0, %s42
      %s43 = sphi 0, %s40
      %s44 = sphi 0, %s43
      %s60 = sphi 0, %s44
      %s64 = sphi 0, %s64
      %s66 = sphi 0, %s64
      %s67 = sphi 0, %s66
      %s81 = sphi 0, %s67
      %s85 = sphi 0, %s85
      %s87 = sphi 0, %s85
      %s88 = sphi 0, %s87
      %s102 = sphi 0, %s88
      %s106 = sphi 0, %s106
      %s108 = sphi 0, %s106
      %s109 = sphi 0, %s108
      %s123 = sphi 0, %s109
      %s127 = sphi 0, %s127
      %s129 = sphi 0, %s127
      %s130 = sphi 0, %s129
      %s144 = sphi 0, %s130
      %s152 = sphi 0, %s154
      %s155 = sphi 0, %s152
      %s156 = sphi 0, %s155
      %s172 = sphi 0, %s156
    $region4: #{tpu_custom_call.1} parent=1 // loop_header_branch
      %21 = sbr.rel (%p19) target = $region8
    $region5: #{tpu_custom_call.1} parent=1 // loop_body
      %s23 = ssub.s32 %s18, 1
      %s24 = ssub.s32 %s18, 2
      %s31 = sadd.s32 1, %s26
      %p32 = scmp.ge.s32.totalorder %s31, 1
      %s33 = scalar_select %p32, 0, %s31
      %s34 = sadd.s32 1, %s25
      %s35 = scalar_select %p32, %s34, %s25
      %p36 = scmp.ge.s32.totalorder %s35, 2
      %s37 = scalar_select %p36, 0, %s35
      %s38 = ssub.s32 %s25, %s37
      %p39 = scmp.eq.s32.totalorder %s38, 0
      %s41 = sadd.s32 %s40, 1
      %s42 = scalar_select %p39, %s40, %s41
      %p45 = pneg %p39
      %p46 = scmp.eq.s32.totalorder %s18, 1
      %p47 = por %p45, %p46
      %p48 = scmp.ne.s32.totalorder %s40, %s43
      %p49 = scmp.eq.s32.totalorder %s18, 0
      %p50 = por %p48, %p49
      %p51 = scmp.ne.s32.totalorder %s40, %s43
      %p52 = scmp.eq.s32.totalorder %s23, 1
      %p53 = por %p51, %p52
      %p54 = scmp.ne.s32.totalorder %s43, %s44
      %p55 = scmp.eq.s32.totalorder %s23, 0
      %p56 = por %p54, %p55
      %p57 = scmp.ne.s32.totalorder %s43, %s44
      %p58 = scmp.eq.s32.totalorder %s24, 1
      %p59 = por %p57, %p58
      %p61 = scmp.ne.s32.totalorder %s44, %s60
      %p62 = scmp.eq.s32.totalorder %s24, 0
      %p63 = por %p61, %p62
      %s65 = sadd.s32 %s64, 1
      %p68 = scmp.eq.s32.totalorder %s18, 1
      %p69 = scmp.ne.s32.totalorder %s64, %s66
      %p70 = scmp.eq.s32.totalorder %s18, 0
      %p71 = por %p69, %p70
      %p72 = scmp.ne.s32.totalorder %s64, %s66
      %p73 = scmp.eq.s32.totalorder %s23, 1
      %p74 = por %p72, %p73
      %p75 = scmp.ne.s32.totalorder %s66, %s67
      %p76 = scmp.eq.s32.totalorder %s23, 0
      %p77 = por %p75, %p76
      %p78 = scmp.ne.s32.totalorder %s66, %s67
      %p79 = scmp.eq.s32.totalorder %s24, 1
      %p80 = por %p78, %p79
      %p82 = scmp.ne.s32.totalorder %s67, %s81
      %p83 = scmp.eq.s32.totalorder %s24, 0
      %p84 = por %p82, %p83
      %s86 = sadd.s32 %s85, 1
      %p89 = scmp.eq.s32.totalorder %s18, 1
      %p90 = scmp.ne.s32.totalorder %s85, %s87
      %p91 = scmp.eq.s32.totalorder %s18, 0
      %p92 = por %p90, %p91
      %p93 = scmp.ne.s32.totalorder %s85, %s87
      %p94 = scmp.eq.s32.totalorder %s23, 1
      %p95 = por %p93, %p94
      %p96 = scmp.ne.s32.totalorder %s87, %s88
      %p97 = scmp.eq.s32.totalorder %s23, 0
      %p98 = por %p96, %p97
      %p99 = scmp.ne.s32.totalorder %s87, %s88
      %p100 = scmp.eq.s32.totalorder %s24, 1
      %p101 = por %p99, %p100
      %p103 = scmp.ne.s32.totalorder %s88, %s102
      %p104 = scmp.eq.s32.totalorder %s24, 0
      %p105 = por %p103, %p104
      %s107 = sadd.s32 %s106, 1
      %p110 = scmp.eq.s32.totalorder %s18, 1
      %p111 = scmp.ne.s32.totalorder %s106, %s108
      %p112 = scmp.eq.s32.totalorder %s18, 0
      %p113 = por %p111, %p112
      %p114 = scmp.ne.s32.totalorder %s106, %s108
      %p115 = scmp.eq.s32.totalorder %s23, 1
      %p116 = por %p114, %p115
      %p117 = scmp.ne.s32.totalorder %s108, %s109
      %p118 = scmp.eq.s32.totalorder %s23, 0
      %p119 = por %p117, %p118
      %p120 = scmp.ne.s32.totalorder %s108, %s109
      %p121 = scmp.eq.s32.totalorder %s24, 1
      %p122 = por %p120, %p121
      %p124 = scmp.ne.s32.totalorder %s109, %s123
      %p125 = scmp.eq.s32.totalorder %s24, 0
      %p126 = por %p124, %p125
      %s128 = sadd.s32 %s127, 1
      %p131 = scmp.eq.s32.totalorder %s18, 1
      %p132 = scmp.ne.s32.totalorder %s127, %s129
      %p133 = scmp.eq.s32.totalorder %s18, 0
      %p134 = por %p132, %p133
      %p135 = scmp.ne.s32.totalorder %s127, %s129
      %p136 = scmp.eq.s32.totalorder %s23, 1
      %p137 = por %p135, %p136
      %p138 = scmp.ne.s32.totalorder %s129, %s130
      %p139 = scmp.eq.s32.totalorder %s23, 0
      %p140 = por %p138, %p139
      %p141 = scmp.ne.s32.totalorder %s129, %s130
      %p142 = scmp.eq.s32.totalorder %s24, 1
      %p143 = por %p141, %p142
      %p145 = scmp.ne.s32.totalorder %s130, %s144
      %p146 = scmp.eq.s32.totalorder %s24, 0
      %p147 = por %p145, %p146
      %s148 = ssub.s32 %s25, %s37
      %s149 = ssub.s32 %s26, %s33
      %s150 = sor.u32 %s148, %s149
      %p151 = scmp.eq.s32.totalorder %s150, 0
      %s153 = sadd.s32 %s152, 1
      %s154 = scalar_select %p151, %s152, %s153
      %p157 = pneg %p151
      %p158 = scmp.eq.s32.totalorder %s18, 1
      %p159 = por %p157, %p158
      %p160 = scmp.ne.s32.totalorder %s152, %s155
      %p161 = scmp.eq.s32.totalorder %s18, 0
      %p162 = por %p160, %p161
      %p163 = scmp.ne.s32.totalorder %s152, %s155
      %p164 = scmp.eq.s32.totalorder %s23, 1
      %p165 = por %p163, %p164
      %p166 = scmp.ne.s32.totalorder %s155, %s156
      %p167 = scmp.eq.s32.totalorder %s23, 0
      %p168 = por %p166, %p167
      %p169 = scmp.ne.s32.totalorder %s155, %s156
      %p170 = scmp.eq.s32.totalorder %s24, 1
      %p171 = por %p169, %p170
      %p173 = scmp.ne.s32.totalorder %s156, %s172
      %p174 = scmp.eq.s32.totalorder %s24, 0
      %p175 = por %p173, %p174
      %p176 = scmp.le.s32.totalorder 1, %s18
      %p177 = scmp.lt.s32.totalorder %s18, 3
      %p178 = pnand %p176, %p177
      %p179 = pneg %p178
      // Predicated region
      $region9: #{tpu_custom_call.1} parent=5 // pred_check
        _
      $region10: #{tpu_custom_call.1} parent=5 // pred_check_branch
        %181 = sbr.rel (%p178) target = $region12
      $region11: #{tpu_custom_call.1} parent=5 // pred_region
        %s182 = ssub.s32 %s18, 1
        // Predicated region
        $region13: #{tpu_custom_call.1} parent=11 // pred_check
          %p183 = pneg %p77
        $region14: #{tpu_custom_call.1} parent=11 // pred_check_branch
          %185 = sbr.rel (%p183) target = $region16
        $region15: #{tpu_custom_call.1} parent=11 // pred_region
          %s187 = ssub.s32 256, 256
          %188 = vsyncadd [#allocation8], %s187
          %s189 = sshll.u32 [#allocation7], 4
          %s190 = int_to_ptr.vmem [resolvable:$true] %s189
          %195 = dma.hbm_to_vmem [thread:$0]  %s1, 256, %s190, [#allocation8], 64, 64, 4
        $region16: #{tpu_custom_call.1} parent=11 // pred_fallthru
          _
        // Predicated region
        $region17: #{tpu_custom_call.1} parent=11 // pred_check
          %p196 = pneg %p98
        $region18: #{tpu_custom_call.1} parent=11 // pred_check_branch
          %198 = sbr.rel (%p196) target = $region20
        $region19: #{tpu_custom_call.1} parent=11 // pred_region
          _
        $region20: #{tpu_custom_call.1} parent=11 // pred_fallthru
          _
        // Predicated region
        $region21: #{tpu_custom_call.1} parent=11 // pred_check
          %p199 = pneg %p119
        $region22: #{tpu_custom_call.1} parent=11 // pred_check_branch
          %201 = sbr.rel (%p199) target = $region24
        $region23: #{tpu_custom_call.1} parent=11 // pred_region
          %s203 = ssub.s32 256, 256
          %204 = vsyncadd [#allocation8], %s203
          %s205 = sshll.u32 [#allocation9], 4
          %s206 = int_to_ptr.vmem [resolvable:$true] %s205
          %211 = dma.hbm_to_vmem [thread:$0]  %s3, 256, %s206, [#allocation8], 64, 64, 4
        $region24: #{tpu_custom_call.1} parent=11 // pred_fallthru
          _
        // Predicated region
        $region25: #{tpu_custom_call.1} parent=11 // pred_check
          %p212 = pneg %p140
        $region26: #{tpu_custom_call.1} parent=11 // pred_check_branch
          %214 = sbr.rel (%p212) target = $region28
        $region27: #{tpu_custom_call.1} parent=11 // pred_region
          _
        $region28: #{tpu_custom_call.1} parent=11 // pred_fallthru
          _
      $region12: #{tpu_custom_call.1} parent=5 // pred_fallthru
        _
      %p215 = scmp.lt.s32.totalorder %s18, 2
      // Predicated region
      $region29: #{tpu_custom_call.1} parent=5 // pred_check
        %p216 = pneg %p215
      $region30: #{tpu_custom_call.1} parent=5 // pred_check_branch
        %218 = sbr.rel (%p216) target = $region32
      $region31: #{tpu_custom_call.1} parent=5 // pred_region
        // Predicated region
        $region33: #{tpu_custom_call.1} parent=31 // pred_check
          %p219 = pneg %p50
        $region34: #{tpu_custom_call.1} parent=31 // pred_check_branch
          %221 = sbr.rel (%p219) target = $region36
        $region35: #{tpu_custom_call.1} parent=31 // pred_region
          %s222 = sand.u32 %s40, 1
          %s223 = scalar_lea.sflag [#allocation5], %s222
          %s224 = sand.u32 %s40, 1
          %s225 = smul.addr %s224, 4
          %s226 = scalar_lea.vmem [#allocation4], %s225
          %s228 = ssub.s32 64, 64
          %229 = vsyncadd %s223, %s228
          %s230 = smul.addr %s25, 64
          %s231 = scalar_lea.hbm %s0, %s230
          %s233 = sshll.u32 %s226, 4
          %s234 = int_to_ptr.vmem [resolvable:$true] %s233
          %236 = dma.hbm_to_vmem [thread:$0]  %s231, 64, %s234, %s223
        $region36: #{tpu_custom_call.1} parent=31 // pred_fallthru
          _
      $region32: #{tpu_custom_call.1} parent=5 // pred_fallthru
        _
      %p237 = scmp.le.s32.totalorder 1, %s18
      %p238 = scmp.lt.s32.totalorder %s18, 3
      %p239 = pnand %p237, %p238
      %p240 = pneg %p239
      // Predicated region
      $region37: #{tpu_custom_call.1} parent=5 // pred_check
        _
      $region38: #{tpu_custom_call.1} parent=5 // pred_check_branch
        %242 = sbr.rel (%p239) target = $region40
      $region39: #{tpu_custom_call.1} parent=5 // pred_region
        %s243 = ssub.s32 %s18, 1
        %s244 = sand.u32 %s43, 1
        %s245 = scalar_lea.sflag [#allocation5], %s244
        %s246 = sand.u32 %s43, 1
        %s247 = smul.addr %s246, 4
        %s248 = scalar_lea.vmem [#allocation4], %s247
        // Predicated region
        $region41: #{tpu_custom_call.1} parent=39 // pred_check
          %p249 = pneg %p56
        $region42: #{tpu_custom_call.1} parent=39 // pred_check_branch
          %251 = sbr.rel (%p249) target = $region44
        $region43: #{tpu_custom_call.1} parent=39 // pred_region
          %252 = dma.done %s245, 64
        $region44: #{tpu_custom_call.1} parent=39 // pred_fallthru
          _
        // Predicated region
        $region45: #{tpu_custom_call.1} parent=39 // pred_check
          %p253 = pneg %p77
        $region46: #{tpu_custom_call.1} parent=39 // pred_check_branch
          %255 = sbr.rel (%p253) target = $region48
        $region47: #{tpu_custom_call.1} parent=39 // pred_region
          %256 = dma.done [#allocation8], 256
        $region48: #{tpu_custom_call.1} parent=39 // pred_fallthru
          _
        // Predicated region
        $region49: #{tpu_custom_call.1} parent=39 // pred_check
          %p257 = pneg %p119
        $region50: #{tpu_custom_call.1} parent=39 // pred_check_branch
          %259 = sbr.rel (%p257) target = $region52
        $region51: #{tpu_custom_call.1} parent=39 // pred_region
          %260 = dma.done [#allocation8], 256
        $region52: #{tpu_custom_call.1} parent=39 // pred_fallthru
          _
        %s261 = sand.u32 %s43, 1
        %s262 = scalar_lea.sflag [#allocation5], %s261
        %s263 = sand.u32 %s43, 1
        %s264 = smul.addr %s263, 4
        %s265 = scalar_lea.vmem [#allocation4], %s264
        %p266 = pneg %p56
        %p267 = pneg %p53
        %p268 = pneg %p77
        %p269 = pneg %p74
        %p270 = pneg %p98
        %p271 = pneg %p95
        %p272 = pneg %p119
        %p273 = pneg %p116
        %p274 = pneg %p140
        %p275 = pneg %p137
        %p276 = pneg %p168
        %p277 = pneg %p165
        %s278 = sand.u32 %s155, 1
        %s279 = scalar_lea.sflag [#allocation6], %s278
        %s280 = sand.u32 %s155, 1
        %s281 = smul.addr %s280, 8
        %s282 = scalar_lea.vmem [#allocation10], %s281
        %p284 = scmp.eq.s32.totalorder %s28, 0
        // Predicated region
        $region53: #{tpu_custom_call.1} parent=39 // pred_check
          %p285 = pneg %p284
        $region54: #{tpu_custom_call.1} parent=39 // pred_check_branch
          %287 = sbr.rel (%p285) target = $region56
        $region55: #{tpu_custom_call.1} parent=39 // pred_region
          %v288 = vld [vmem:[%s248] sm:$0xf]
          %v289 = vld [vmem:[#allocation7] sm:$0xf]
          %v290 = vld [vmem:[#allocation7 + $0x4] sm:$0xf]
          %v291 = vld [vmem:[#allocation7 + $0x8] sm:$0xf]
          %v292 = vld [vmem:[#allocation7 + $0xc] sm:$0xf]
          %v293 = vld [vmem:[%s2] sm:$0x1]
          %v295 = vlaneseq
          %v296 = vshrl.u32 %v295, 7
          %v297 = vsub.s32 0, %v296
          %v298 = vrot.slane %v293, %v297
          %v304 = vunpack.c.l.b16 %v289
          %v305 = vunpack.c.l.b16 %v290
          %v306 = vunpack.c.l.b16 %v291
          %v307 = vunpack.c.l.b16 %v292
          %v308 = vpack.c.b16 %v305, %v304
          %v309 = vpack.c.b16 %v307, %v306
          %vm312 = vcmask 261120
          %v314 = vsel %vm312, %v288, 0
          %316 = vmatprep.subr.bf16.mxu0 0
          %317 = vmatpush1.bf16.msra.mxu0 0
          %318 = vmatprep.subr.bf16.mxu0 0
          %319 = vmatpush1.bf16.msra.mxu0 0
          %320 = vmatprep.subr.bf16.mxu0 0
          %321 = vmatpush1.bf16.msra.mxu0 0
          %322 = vmatprep.subr.bf16.mxu0 0
          %323 = vmatpush1.bf16.msra.mxu0 0
          %324 = vmatprep.subr.bf16.mxu0 0
          %325 = vmatpush1.bf16.msra.mxu0 0
          %326 = vmatprep.subr.bf16.mxu0 0
          %327 = vmatpush1.bf16.msra.mxu0 0
          %328 = vmatprep.subr.bf16.mxu0 0
          %329 = vmatpush1.bf16.msra.mxu0 %v309
          %330 = vmatprep.subr.bf16.mxu0 0
          %331 = vmatpush1.bf16.msra.mxu0 %v308
          %332 = vmatprep.subr.bf16.mxu0 0
          %333 = vmatpush2.bf16.msra.mxu0 0
          %334 = vmatprep.subr.bf16.mxu0 0
          %335 = vmatpush2.bf16.msra.mxu0 0
          %336 = vmatprep.subr.bf16.mxu0 0
          %337 = vmatpush2.bf16.msra.mxu0 0
          %338 = vmatprep.subr.bf16.mxu0 0
          %339 = vmatpush2.bf16.msra.mxu0 0
          %340 = vmatprep.subr.bf16.mxu0 0
          %341 = vmatpush2.bf16.msra.mxu0 0
          %342 = vmatprep.subr.bf16.mxu0 0
          %343 = vmatpush2.bf16.msra.mxu0 0
          %344 = vmatprep.subr.bf16.mxu0 0
          %345 = vmatpush2.bf16.msra.mxu0 0
          %346 = vmatprep.subr.bf16.mxu0 0
          %347 = vmatpush2.bf16.msra.mxu0 0
          %348 = vmatprep.mubr.bf16.mxu0 0
          %349 = vmatmul.mubr.bf16.gmra.mxu0 %v314
          %v350 = vpop.f32.mrf.mxu0
          %v351 = vadd.f32 %v298, %v350
          %v352 = vpop.f32.mrf.mxu0
          %v353 = vpop.f32.mrf.mxu0
          %v354 = vpop.f32.mrf.mxu0
          %355 = vdwg.mxu0
          %v356 = vpack.c.bf16 %v351, %v351
          %vm357 = vcmask 781312
          %358 = vst.msk [vmem:[#allocation2] sm:$0xf] %vm357, %v356
        $region56: #{tpu_custom_call.1} parent=39 // pred_fallthru
          _
        %s359 = smul.u32 %s28, 8
        %s360 = sshra.s32 %s359, 3
        %s361 = sand.u32 %s359, 7
        %s362 = smul.addr %s360, 4
        %s363 = scalar_lea.vmem [#allocation2], %s362
        %v364 = vld [vmem:[%s363] sm:$0xf]
        %v365 = vld [vmem:[#allocation2] sm:$0xf]
        %v367 = vunpack.c.l.b16 %v365
        %v368 = vpack.c.b16 %v367, %v367
        %369 = vrot.lane.b32.xlu0 %v368, 96
        %v370 = vpop.permute.xlu0 %369
        %vm371 = vcmask 64512
        %v373 = vsel %vm371, %v364, 0
        %v376 = vsel %vm371, %v370, 0
        %378 = vmatprep.subr.bf16.mxu0 0
        %379 = vmatpush1.bf16.xpose.msra.mxu0 0
        %380 = vmatprep.subr.bf16.mxu0 0
        %381 = vmatpush1.bf16.xpose.msra.mxu0 0
        %382 = vmatprep.subr.bf16.mxu0 0
        %383 = vmatpush1.bf16.xpose.msra.mxu0 0
        %384 = vmatprep.subr.bf16.mxu0 0
        %385 = vmatpush1.bf16.xpose.msra.mxu0 0
        %386 = vmatprep.subr.bf16.mxu0 0
        %387 = vmatpush1.bf16.xpose.msra.mxu0 0
        %388 = vmatprep.subr.bf16.mxu0 0
        %389 = vmatpush1.bf16.xpose.msra.mxu0 0
        %390 = vmatprep.subr.bf16.mxu0 0
        %391 = vmatpush1.bf16.xpose.msra.mxu0 0
        %392 = vmatprep.subr.bf16.mxu0 0
        %393 = vmatpush1.bf16.xpose.msra.mxu0 %v376
        %394 = vmatprep.subr.bf16.mxu0 0
        %395 = vmatpush2.bf16.xpose.msra.mxu0 0
        %396 = vmatprep.subr.bf16.mxu0 0
        %397 = vmatpush2.bf16.xpose.msra.mxu0 0
        %398 = vmatprep.subr.bf16.mxu0 0
        %399 = vmatpush2.bf16.xpose.msra.mxu0 0
        %400 = vmatprep.subr.bf16.mxu0 0
        %401 = vmatpush2.bf16.xpose.msra.mxu0 0
        %402 = vmatprep.subr.bf16.mxu0 0
        %403 = vmatpush2.bf16.xpose.msra.mxu0 0
        %404 = vmatprep.subr.bf16.mxu0 0
        %405 = vmatpush2.bf16.xpose.msra.mxu0 0
        %406 = vmatprep.subr.bf16.mxu0 0
        %407 = vmatpush2.bf16.xpose.msra.mxu0 0
        %408 = vmatprep.subr.bf16.mxu0 0
        %409 = vmatpush2.bf16.xpose.msra.mxu0 0
        %410 = vmatprep.mubr.bf16.mxu0 0
        %411 = vmatmul.mubr.bf16.gmra.mxu0 %v373
        %v412 = vpop.f32.mrf.mxu0
        %v413 = vadd.f32 0.0, %v412
        %v414 = vpop.f32.mrf.mxu0
        %v415 = vpop.f32.mrf.mxu0
        %v416 = vpop.f32.mrf.mxu0
        %417 = vdwg.mxu0
        %v418 = vsel %vm371, %v413, -inf
        %419 = vmax.xlane.f32.xlu0 %v418
        %v420 = vpop.xlane.xlu0 %419
        %v421 = vsub.f32 %v413, %v420
        %v422 = vmul.f32 %v421, 1.442695
        %v423 = vpow.pop %v422
        %v424 = vsel %vm371, %v423, 0.0
        %425 = vadd.xlane.f32.xlu0 %v424
        %v426 = vpop.xlane.xlu0 %425
        %v427 = vrcp.pop %v426
        %v428 = vmul.f32 %v423, %v427
        %v429 = vpack.c.bf16 %v428, %v428
        %430 = vrot.lane.b32.xlu0 %v368, 64
        %v431 = vpop.permute.xlu0 %430
        %v433 = vsel %vm371, %v429, 0
        %vm435 = vcmask 1043456
        %v437 = vsel %vm435, %v431, 0
        %439 = vmatprep.subr.bf16.mxu0 0
        %440 = vmatpush1.bf16.msra.mxu0 0
        %441 = vmatprep.subr.bf16.mxu0 0
        %442 = vmatpush1.bf16.msra.mxu0 0
        %443 = vmatprep.subr.bf16.mxu0 0
        %444 = vmatpush1.bf16.msra.mxu0 0
        %445 = vmatprep.subr.bf16.mxu0 0
        %446 = vmatpush1.bf16.msra.mxu0 0
        %447 = vmatprep.subr.bf16.mxu0 0
        %448 = vmatpush1.bf16.msra.mxu0 0
        %449 = vmatprep.subr.bf16.mxu0 0
        %450 = vmatpush1.bf16.msra.mxu0 0
        %451 = vmatprep.subr.bf16.mxu0 0
        %452 = vmatpush1.bf16.msra.mxu0 0
        %453 = vmatprep.subr.bf16.mxu0 0
        %454 = vmatpush1.bf16.msra.mxu0 %v437
        %455 = vmatprep.subr.bf16.mxu0 0
        %456 = vmatpush2.bf16.msra.mxu0 0
        %457 = vmatprep.subr.bf16.mxu0 0
        %458 = vmatpush2.bf16.msra.mxu0 0
        %459 = vmatprep.subr.bf16.mxu0 0
        %460 = vmatpush2.bf16.msra.mxu0 0
        %461 = vmatprep.subr.bf16.mxu0 0
        %462 = vmatpush2.bf16.msra.mxu0 0
        %463 = vmatprep.subr.bf16.mxu0 0
        %464 = vmatpush2.bf16.msra.mxu0 0
        %465 = vmatprep.subr.bf16.mxu0 0
        %466 = vmatpush2.bf16.msra.mxu0 0
        %467 = vmatprep.subr.bf16.mxu0 0
        %468 = vmatpush2.bf16.msra.mxu0 0
        %469 = vmatprep.subr.bf16.mxu0 0
        %470 = vmatpush2.bf16.msra.mxu0 0
        %471 = vmatprep.mubr.bf16.mxu0 0
        %472 = vmatmul.mubr.bf16.gmra.mxu0 %v433
        %v473 = vpop.f32.mrf.mxu0
        %v474 = vadd.f32 0.0, %v473
        %v475 = vpop.f32.mrf.mxu0
        %v476 = vpop.f32.mrf.mxu0
        %v477 = vpop.f32.mrf.mxu0
        %478 = vdwg.mxu0
        %v479 = vpack.c.bf16 %v474, %v474
        %vm480 = vcmask 60416
        %481 = vst.msk [vmem:[#allocation3] sm:$0xf] %vm480, %v479
        %v482 = vld [vmem:[%s363] sm:$0xf]
        %v483 = vld [vmem:[#allocation2] sm:$0xf]
        %v485 = vunpack.c.l.b16 %v482
        %v486 = vpack.c.b16 %v485, %v485
        %487 = vrot.lane.b32.xlu0 %v486, 120
        %v488 = vpop.permute.xlu0 %487
        %v490 = vunpack.c.l.b16 %v483
        %v491 = vpack.c.b16 %v490, %v490
        %492 = vrot.lane.b32.xlu0 %v491, 88
        %v493 = vpop.permute.xlu0 %492
        %v495 = vsel %vm371, %v488, 0
        %v498 = vsel %vm371, %v493, 0
        %500 = vmatprep.subr.bf16.mxu0 0
        %501 = vmatpush1.bf16.xpose.msra.mxu0 0
        %502 = vmatprep.subr.bf16.mxu0 0
        %503 = vmatpush1.bf16.xpose.msra.mxu0 0
        %504 = vmatprep.subr.bf16.mxu0 0
        %505 = vmatpush1.bf16.xpose.msra.mxu0 0
        %506 = vmatprep.subr.bf16.mxu0 0
        %507 = vmatpush1.bf16.xpose.msra.mxu0 0
        %508 = vmatprep.subr.bf16.mxu0 0
        %509 = vmatpush1.bf16.xpose.msra.mxu0 0
        %510 = vmatprep.subr.bf16.mxu0 0
        %511 = vmatpush1.bf16.xpose.msra.mxu0 0
        %512 = vmatprep.subr.bf16.mxu0 0
        %513 = vmatpush1.bf16.xpose.msra.mxu0 0
        %514 = vmatprep.subr.bf16.mxu0 0
        %515 = vmatpush1.bf16.xpose.msra.mxu0 %v498
        %516 = vmatprep.subr.bf16.mxu0 0
        %517 = vmatpush2.bf16.xpose.msra.mxu0 0
        %518 = vmatprep.subr.bf16.mxu0 0
        %519 = vmatpush2.bf16.xpose.msra.mxu0 0
        %520 = vmatprep.subr.bf16.mxu0 0
        %521 = vmatpush2.bf16.xpose.msra.mxu0 0
        %522 = vmatprep.subr.bf16.mxu0 0
        %523 = vmatpush2.bf16.xpose.msra.mxu0 0
        %524 = vmatprep.subr.bf16.mxu0 0
        %525 = vmatpush2.bf16.xpose.msra.mxu0 0
        %526 = vmatprep.subr.bf16.mxu0 0
        %527 = vmatpush2.bf16.xpose.msra.mxu0 0
        %528 = vmatprep.subr.bf16.mxu0 0
        %529 = vmatpush2.bf16.xpose.msra.mxu0 0
        %530 = vmatprep.subr.bf16.mxu0 0
        %531 = vmatpush2.bf16.xpose.msra.mxu0 0
        %532 = vmatprep.mubr.bf16.mxu0 0
        %533 = vmatmul.mubr.bf16.gmra.mxu0 %v495
        %v534 = vpop.f32.mrf.mxu0
        %v535 = vadd.f32 0.0, %v534
        %v536 = vpop.f32.mrf.mxu0
        %v537 = vpop.f32.mrf.mxu0
        %v538 = vpop.f32.mrf.mxu0
        %539 = vdwg.mxu0
        %v540 = vsel %vm371, %v535, -inf
        %541 = vmax.xlane.f32.xlu0 %v540
        %v542 = vpop.xlane.xlu0 %541
        %v543 = vsub.f32 %v535, %v542
        %v544 = vmul.f32 %v543, 1.442695
        %v545 = vpow.pop %v544
        %v546 = vsel %vm371, %v545, 0.0
        %547 = vadd.xlane.f32.xlu0 %v546
        %v548 = vpop.xlane.xlu0 %547
        %v549 = vrcp.pop %v548
        %v550 = vmul.f32 %v545, %v549
        %v551 = vpack.c.bf16 %v550, %v550
        %552 = vrot.lane.b32.xlu0 %v491, 56
        %v553 = vpop.permute.xlu0 %552
        %v555 = vsel %vm371, %v551, 0
        %v558 = vsel %vm435, %v553, 0
        %560 = vmatprep.subr.bf16.mxu0 0
        %561 = vmatpush1.bf16.msra.mxu0 0
        %562 = vmatprep.subr.bf16.mxu0 0
        %563 = vmatpush1.bf16.msra.mxu0 0
        %564 = vmatprep.subr.bf16.mxu0 0
        %565 = vmatpush1.bf16.msra.mxu0 0
        %566 = vmatprep.subr.bf16.mxu0 0
        %567 = vmatpush1.bf16.msra.mxu0 0
        %568 = vmatprep.subr.bf16.mxu0 0
        %569 = vmatpush1.bf16.msra.mxu0 0
        %570 = vmatprep.subr.bf16.mxu0 0
        %571 = vmatpush1.bf16.msra.mxu0 0
        %572 = vmatprep.subr.bf16.mxu0 0
        %573 = vmatpush1.bf16.msra.mxu0 0
        %574 = vmatprep.subr.bf16.mxu0 0
        %575 = vmatpush1.bf16.msra.mxu0 %v558
        %576 = vmatprep.subr.bf16.mxu0 0
        %577 = vmatpush2.bf16.msra.mxu0 0
        %578 = vmatprep.subr.bf16.mxu0 0
        %579 = vmatpush2.bf16.msra.mxu0 0
        %580 = vmatprep.subr.bf16.mxu0 0
        %581 = vmatpush2.bf16.msra.mxu0 0
        %582 = vmatprep.subr.bf16.mxu0 0
        %583 = vmatpush2.bf16.msra.mxu0 0
        %584 = vmatprep.subr.bf16.mxu0 0
        %585 = vmatpush2.bf16.msra.mxu0 0
        %586 = vmatprep.subr.bf16.mxu0 0
        %587 = vmatpush2.bf16.msra.mxu0 0
        %588 = vmatprep.subr.bf16.mxu0 0
        %589 = vmatpush2.bf16.msra.mxu0 0
        %590 = vmatprep.subr.bf16.mxu0 0
        %591 = vmatpush2.bf16.msra.mxu0 0
        %592 = vmatprep.mubr.bf16.mxu0 0
        %593 = vmatmul.mubr.bf16.gmra.mxu0 %v555
        %v594 = vpop.f32.mrf.mxu0
        %v595 = vadd.f32 0.0, %v594
        %v596 = vpop.f32.mrf.mxu0
        %v597 = vpop.f32.mrf.mxu0
        %v598 = vpop.f32.mrf.mxu0
        %599 = vdwg.mxu0
        %v600 = vpack.c.bf16 %v595, %v595
        %v602 = vunpack.c.l.b16 %v600
        %v603 = vpack.c.b16 %v602, %v602
        %604 = vrot.lane.b32.xlu0 %v603, 8
        %v605 = vpop.permute.xlu0 %604
        %vm607 = vcmask 126016
        %608 = vst.msk [vmem:[#allocation3] sm:$0xf] %vm607, %v605
        %v609 = vld [vmem:[%s363] sm:$0xf]
        %v610 = vld [vmem:[#allocation2] sm:$0xf]
        %v612 = vunpack.c.l.b16 %v609
        %v613 = vpack.c.b16 %v612, %v612
        %614 = vrot.lane.b32.xlu0 %v613, 112
        %v615 = vpop.permute.xlu0 %614
        %v617 = vunpack.c.l.b16 %v610
        %v618 = vpack.c.b16 %v617, %v617
        %619 = vrot.lane.b32.xlu0 %v618, 80
        %v620 = vpop.permute.xlu0 %619
        %v622 = vsel %vm371, %v615, 0
        %v625 = vsel %vm371, %v620, 0
        %627 = vmatprep.subr.bf16.mxu0 0
        %628 = vmatpush1.bf16.xpose.msra.mxu0 0
        %629 = vmatprep.subr.bf16.mxu0 0
        %630 = vmatpush1.bf16.xpose.msra.mxu0 0
        %631 = vmatprep.subr.bf16.mxu0 0
        %632 = vmatpush1.bf16.xpose.msra.mxu0 0
        %633 = vmatprep.subr.bf16.mxu0 0
        %634 = vmatpush1.bf16.xpose.msra.mxu0 0
        %635 = vmatprep.subr.bf16.mxu0 0
        %636 = vmatpush1.bf16.xpose.msra.mxu0 0
        %637 = vmatprep.subr.bf16.mxu0 0
        %638 = vmatpush1.bf16.xpose.msra.mxu0 0
        %639 = vmatprep.subr.bf16.mxu0 0
        %640 = vmatpush1.bf16.xpose.msra.mxu0 0
        %641 = vmatprep.subr.bf16.mxu0 0
        %642 = vmatpush1.bf16.xpose.msra.mxu0 %v625
        %643 = vmatprep.subr.bf16.mxu0 0
        %644 = vmatpush2.bf16.xpose.msra.mxu0 0
        %645 = vmatprep.subr.bf16.mxu0 0
        %646 = vmatpush2.bf16.xpose.msra.mxu0 0
        %647 = vmatprep.subr.bf16.mxu0 0
        %648 = vmatpush2.bf16.xpose.msra.mxu0 0
        %649 = vmatprep.subr.bf16.mxu0 0
        %650 = vmatpush2.bf16.xpose.msra.mxu0 0
        %651 = vmatprep.subr.bf16.mxu0 0
        %652 = vmatpush2.bf16.xpose.msra.mxu0 0
        %653 = vmatprep.subr.bf16.mxu0 0
        %654 = vmatpush2.bf16.xpose.msra.mxu0 0
        %655 = vmatprep.subr.bf16.mxu0 0
        %656 = vmatpush2.bf16.xpose.msra.mxu0 0
        %657 = vmatprep.subr.bf16.mxu0 0
        %658 = vmatpush2.bf16.xpose.msra.mxu0 0
        %659 = vmatprep.mubr.bf16.mxu0 0
        %660 = vmatmul.mubr.bf16.gmra.mxu0 %v622
        %v661 = vpop.f32.mrf.mxu0
        %v662 = vadd.f32 0.0, %v661
        %v663 = vpop.f32.mrf.mxu0
        %v664 = vpop.f32.mrf.mxu0
        %v665 = vpop.f32.mrf.mxu0
        %666 = vdwg.mxu0
        %v667 = vsel %vm371, %v662, -inf
        %668 = vmax.xlane.f32.xlu0 %v667
        %v669 = vpop.xlane.xlu0 %668
        %v670 = vsub.f32 %v662, %v669
        %v671 = vmul.f32 %v670, 1.442695
        %v672 = vpow.pop %v671
        %v673 = vsel %vm371, %v672, 0.0
        %674 = vadd.xlane.f32.xlu0 %v673
        %v675 = vpop.xlane.xlu0 %674
        %v676 = vrcp.pop %v675
        %v677 = vmul.f32 %v672, %v676
        %v678 = vpack.c.bf16 %v677, %v677
        %679 = vrot.lane.b32.xlu0 %v618, 48
        %v680 = vpop.permute.xlu0 %679
        %v682 = vsel %vm371, %v678, 0
        %v685 = vsel %vm435, %v680, 0
        %687 = vmatprep.subr.bf16.mxu0 0
        %688 = vmatpush1.bf16.msra.mxu0 0
        %689 = vmatprep.subr.bf16.mxu0 0
        %690 = vmatpush1.bf16.msra.mxu0 0
        %691 = vmatprep.subr.bf16.mxu0 0
        %692 = vmatpush1.bf16.msra.mxu0 0
        %693 = vmatprep.subr.bf16.mxu0 0
        %694 = vmatpush1.bf16.msra.mxu0 0
        %695 = vmatprep.subr.bf16.mxu0 0
        %696 = vmatpush1.bf16.msra.mxu0 0
        %697 = vmatprep.subr.bf16.mxu0 0
        %698 = vmatpush1.bf16.msra.mxu0 0
        %699 = vmatprep.subr.bf16.mxu0 0
        %700 = vmatpush1.bf16.msra.mxu0 0
        %701 = vmatprep.subr.bf16.mxu0 0
        %702 = vmatpush1.bf16.msra.mxu0 %v685
        %703 = vmatprep.subr.bf16.mxu0 0
        %704 = vmatpush2.bf16.msra.mxu0 0
        %705 = vmatprep.subr.bf16.mxu0 0
        %706 = vmatpush2.bf16.msra.mxu0 0
        %707 = vmatprep.subr.bf16.mxu0 0
        %708 = vmatpush2.bf16.msra.mxu0 0
        %709 = vmatprep.subr.bf16.mxu0 0
        %710 = vmatpush2.bf16.msra.mxu0 0
        %711 = vmatprep.subr.bf16.mxu0 0
        %712 = vmatpush2.bf16.msra.mxu0 0
        %713 = vmatprep.subr.bf16.mxu0 0
        %714 = vmatpush2.bf16.msra.mxu0 0
        %715 = vmatprep.subr.bf16.mxu0 0
        %716 = vmatpush2.bf16.msra.mxu0 0
        %717 = vmatprep.subr.bf16.mxu0 0
        %718 = vmatpush2.bf16.msra.mxu0 0
        %719 = vmatprep.mubr.bf16.mxu0 0
        %720 = vmatmul.mubr.bf16.gmra.mxu0 %v682
        %v721 = vpop.f32.mrf.mxu0
        %v722 = vadd.f32 0.0, %v721
        %v723 = vpop.f32.mrf.mxu0
        %v724 = vpop.f32.mrf.mxu0
        %v725 = vpop.f32.mrf.mxu0
        %726 = vdwg.mxu0
        %v727 = vpack.c.bf16 %v722, %v722
        %v729 = vunpack.c.l.b16 %v727
        %v730 = vpack.c.b16 %v729, %v729
        %731 = vrot.lane.b32.xlu0 %v730, 16
        %v732 = vpop.permute.xlu0 %731
        %vm734 = vcmask 191616
        %735 = vst.msk [vmem:[#allocation3] sm:$0xf] %vm734, %v732
        %v736 = vld [vmem:[%s363] sm:$0xf]
        %v737 = vld [vmem:[#allocation2] sm:$0xf]
        %v739 = vunpack.c.l.b16 %v736
        %v740 = vpack.c.b16 %v739, %v739
        %741 = vrot.lane.b32.xlu0 %v740, 104
        %v742 = vpop.permute.xlu0 %741
        %v744 = vunpack.c.l.b16 %v737
        %v745 = vpack.c.b16 %v744, %v744
        %746 = vrot.lane.b32.xlu0 %v745, 72
        %v747 = vpop.permute.xlu0 %746
        %v749 = vsel %vm371, %v742, 0
        %v752 = vsel %vm371, %v747, 0
        %754 = vmatprep.subr.bf16.mxu0 0
        %755 = vmatpush1.bf16.xpose.msra.mxu0 0
        %756 = vmatprep.subr.bf16.mxu0 0
        %757 = vmatpush1.bf16.xpose.msra.mxu0 0
        %758 = vmatprep.subr.bf16.mxu0 0
        %759 = vmatpush1.bf16.xpose.msra.mxu0 0
        %760 = vmatprep.subr.bf16.mxu0 0
        %761 = vmatpush1.bf16.xpose.msra.mxu0 0
        %762 = vmatprep.subr.bf16.mxu0 0
        %763 = vmatpush1.bf16.xpose.msra.mxu0 0
        %764 = vmatprep.subr.bf16.mxu0 0
        %765 = vmatpush1.bf16.xpose.msra.mxu0 0
        %766 = vmatprep.subr.bf16.mxu0 0
        %767 = vmatpush1.bf16.xpose.msra.mxu0 0
        %768 = vmatprep.subr.bf16.mxu0 0
        %769 = vmatpush1.bf16.xpose.msra.mxu0 %v752
        %770 = vmatprep.subr.bf16.mxu0 0
        %771 = vmatpush2.bf16.xpose.msra.mxu0 0
        %772 = vmatprep.subr.bf16.mxu0 0
        %773 = vmatpush2.bf16.xpose.msra.mxu0 0
        %774 = vmatprep.subr.bf16.mxu0 0
        %775 = vmatpush2.bf16.xpose.msra.mxu0 0
        %776 = vmatprep.subr.bf16.mxu0 0
        %777 = vmatpush2.bf16.xpose.msra.mxu0 0
        %778 = vmatprep.subr.bf16.mxu0 0
        %779 = vmatpush2.bf16.xpose.msra.mxu0 0
        %780 = vmatprep.subr.bf16.mxu0 0
        %781 = vmatpush2.bf16.xpose.msra.mxu0 0
        %782 = vmatprep.subr.bf16.mxu0 0
        %783 = vmatpush2.bf16.xpose.msra.mxu0 0
        %784 = vmatprep.subr.bf16.mxu0 0
        %785 = vmatpush2.bf16.xpose.msra.mxu0 0
        %786 = vmatprep.mubr.bf16.mxu0 0
        %787 = vmatmul.mubr.bf16.gmra.mxu0 %v749
        %v788 = vpop.f32.mrf.mxu0
        %v789 = vadd.f32 0.0, %v788
        %v790 = vpop.f32.mrf.mxu0
        %v791 = vpop.f32.mrf.mxu0
        %v792 = vpop.f32.mrf.mxu0
        %793 = vdwg.mxu0
        %v794 = vsel %vm371, %v789, -inf
        %795 = vmax.xlane.f32.xlu0 %v794
        %v796 = vpop.xlane.xlu0 %795
        %v797 = vsub.f32 %v789, %v796
        %v798 = vmul.f32 %v797, 1.442695
        %v799 = vpow.pop %v798
        %v800 = vsel %vm371, %v799, 0.0
        %801 = vadd.xlane.f32.xlu0 %v800
        %v802 = vpop.xlane.xlu0 %801
        %v803 = vrcp.pop %v802
        %v804 = vmul.f32 %v799, %v803
        %v805 = vpack.c.bf16 %v804, %v804
        %806 = vrot.lane.b32.xlu0 %v745, 40
        %v807 = vpop.permute.xlu0 %806
        %v809 = vsel %vm371, %v805, 0
        %v812 = vsel %vm435, %v807, 0
        %814 = vmatprep.subr.bf16.mxu0 0
        %815 = vmatpush1.bf16.msra.mxu0 0
        %816 = vmatprep.subr.bf16.mxu0 0
        %817 = vmatpush1.bf16.msra.mxu0 0
        %818 = vmatprep.subr.bf16.mxu0 0
        %819 = vmatpush1.bf16.msra.mxu0 0
        %820 = vmatprep.subr.bf16.mxu0 0
        %821 = vmatpush1.bf16.msra.mxu0 0
        %822 = vmatprep.subr.bf16.mxu0 0
        %823 = vmatpush1.bf16.msra.mxu0 0
        %824 = vmatprep.subr.bf16.mxu0 0
        %825 = vmatpush1.bf16.msra.mxu0 0
        %826 = vmatprep.subr.bf16.mxu0 0
        %827 = vmatpush1.bf16.msra.mxu0 0
        %828 = vmatprep.subr.bf16.mxu0 0
        %829 = vmatpush1.bf16.msra.mxu0 %v812
        %830 = vmatprep.subr.bf16.mxu0 0
        %831 = vmatpush2.bf16.msra.mxu0 0
        %832 = vmatprep.subr.bf16.mxu0 0
        %833 = vmatpush2.bf16.msra.mxu0 0
        %834 = vmatprep.subr.bf16.mxu0 0
        %835 = vmatpush2.bf16.msra.mxu0 0
        %836 = vmatprep.subr.bf16.mxu0 0
        %837 = vmatpush2.bf16.msra.mxu0 0
        %838 = vmatprep.subr.bf16.mxu0 0
        %839 = vmatpush2.bf16.msra.mxu0 0
        %840 = vmatprep.subr.bf16.mxu0 0
        %841 = vmatpush2.bf16.msra.mxu0 0
        %842 = vmatprep.subr.bf16.mxu0 0
        %843 = vmatpush2.bf16.msra.mxu0 0
        %844 = vmatprep.subr.bf16.mxu0 0
        %845 = vmatpush2.bf16.msra.mxu0 0
        %846 = vmatprep.mubr.bf16.mxu0 0
        %847 = vmatmul.mubr.bf16.gmra.mxu0 %v809
        %v848 = vpop.f32.mrf.mxu0
        %v849 = vadd.f32 0.0, %v848
        %v850 = vpop.f32.mrf.mxu0
        %v851 = vpop.f32.mrf.mxu0
        %v852 = vpop.f32.mrf.mxu0
        %853 = vdwg.mxu0
        %v854 = vpack.c.bf16 %v849, %v849
        %v856 = vunpack.c.l.b16 %v854
        %v857 = vpack.c.b16 %v856, %v856
        %858 = vrot.lane.b32.xlu0 %v857, 24
        %v859 = vpop.permute.xlu0 %858
        %vm861 = vcmask 257216
        %862 = vst.msk [vmem:[#allocation3] sm:$0xf] %vm861, %v859
        %v863 = vld [vmem:[#allocation3] sm:$0xf]
        %v864 = vld [vmem:[#allocation9] sm:$0xf]
        %v865 = vld [vmem:[#allocation9 + $0x4] sm:$0xf]
        %v866 = vld [vmem:[#allocation9 + $0x8] sm:$0xf]
        %v867 = vld [vmem:[#allocation9 + $0xc] sm:$0xf]
        %v868 = vld [vmem:[%s4] sm:$0x1]
        %v870 = vlaneseq
        %v871 = vshrl.u32 %v870, 7
        %v872 = vsub.s32 0, %v871
        %v873 = vrot.slane %v868, %v872
        %v879 = vunpack.c.l.b16 %v864
        %v880 = vunpack.c.l.b16 %v865
        %v881 = vunpack.c.l.b16 %v866
        %v882 = vunpack.c.l.b16 %v867
        %v883 = vpack.c.b16 %v880, %v879
        %v884 = vpack.c.b16 %v882, %v881
        %vm887 = vcmask 261120
        %v889 = vsel %vm887, %v863, 0
        %891 = vmatprep.subr.bf16.mxu0 0
        %892 = vmatpush1.bf16.msra.mxu0 0
        %893 = vmatprep.subr.bf16.mxu0 0
        %894 = vmatpush1.bf16.msra.mxu0 0
        %895 = vmatprep.subr.bf16.mxu0 0
        %896 = vmatpush1.bf16.msra.mxu0 0
        %897 = vmatprep.subr.bf16.mxu0 0
        %898 = vmatpush1.bf16.msra.mxu0 0
        %899 = vmatprep.subr.bf16.mxu0 0
        %900 = vmatpush1.bf16.msra.mxu0 0
        %901 = vmatprep.subr.bf16.mxu0 0
        %902 = vmatpush1.bf16.msra.mxu0 0
        %903 = vmatprep.subr.bf16.mxu0 0
        %904 = vmatpush1.bf16.msra.mxu0 %v884
        %905 = vmatprep.subr.bf16.mxu0 0
        %906 = vmatpush1.bf16.msra.mxu0 %v883
        %907 = vmatprep.subr.bf16.mxu0 0
        %908 = vmatpush2.bf16.msra.mxu0 0
        %909 = vmatprep.subr.bf16.mxu0 0
        %910 = vmatpush2.bf16.msra.mxu0 0
        %911 = vmatprep.subr.bf16.mxu0 0
        %912 = vmatpush2.bf16.msra.mxu0 0
        %913 = vmatprep.subr.bf16.mxu0 0
        %914 = vmatpush2.bf16.msra.mxu0 0
        %915 = vmatprep.subr.bf16.mxu0 0
        %916 = vmatpush2.bf16.msra.mxu0 0
        %917 = vmatprep.subr.bf16.mxu0 0
        %918 = vmatpush2.bf16.msra.mxu0 0
        %919 = vmatprep.subr.bf16.mxu0 0
        %920 = vmatpush2.bf16.msra.mxu0 0
        %921 = vmatprep.subr.bf16.mxu0 0
        %922 = vmatpush2.bf16.msra.mxu0 0
        %923 = vmatprep.mubr.bf16.mxu0 0
        %924 = vmatmul.mubr.bf16.gmra.mxu0 %v889
        %v925 = vpop.f32.mrf.mxu0
        %v926 = vadd.f32 %v873, %v925
        %v927 = vpop.f32.mrf.mxu0
        %v928 = vpop.f32.mrf.mxu0
        %v929 = vpop.f32.mrf.mxu0
        %930 = vdwg.mxu0
        %931 = vst.msk [vmem:[%s282] sm:$0xff] %vm887, %v926
        %s932 = sand.u32 %s155, 1
        %s933 = scalar_lea.sflag [#allocation6], %s932
        %s934 = sand.u32 %s155, 1
        %s935 = smul.addr %s934, 8
        %s936 = scalar_lea.vmem [#allocation10], %s935
        // Predicated region
        $region57: #{tpu_custom_call.1} parent=39 // pred_check
          %p937 = pneg %p165
        $region58: #{tpu_custom_call.1} parent=39 // pred_check_branch
          %939 = sbr.rel (%p937) target = $region60
        $region59: #{tpu_custom_call.1} parent=39 // pred_region
          %s941 = ssub.s32 128, 128
          %942 = vsyncadd %s933, %s941
          %s943 = sadd.s32 %s28, %s27
          %s944 = smul.addr %s943, 128
          %s945 = scalar_lea.hbm %s5, %s944
          %s947 = sshll.u32 %s936, 4
          %s948 = int_to_ptr.vmem [resolvable:$true] %s947
          %950 = dma.vmem_to_hbm [thread:$0]  %s948, 128, %s945, %s933
        $region60: #{tpu_custom_call.1} parent=39 // pred_fallthru
          _
      $region40: #{tpu_custom_call.1} parent=5 // pred_fallthru
        _
      %p951 = scmp.le.s32.totalorder 2, %s18
      // Predicated region
      $region61: #{tpu_custom_call.1} parent=5 // pred_check
        %p952 = pneg %p951
      $region62: #{tpu_custom_call.1} parent=5 // pred_check_branch
        %954 = sbr.rel (%p952) target = $region64
      $region63: #{tpu_custom_call.1} parent=5 // pred_region
        %s955 = ssub.s32 %s18, 2
        // Predicated region
        $region65: #{tpu_custom_call.1} parent=63 // pred_check
          %p956 = pneg %p171
        $region66: #{tpu_custom_call.1} parent=63 // pred_check_branch
          %958 = sbr.rel (%p956) target = $region68
        $region67: #{tpu_custom_call.1} parent=63 // pred_region
          %s959 = sand.u32 %s156, 1
          %s960 = scalar_lea.sflag [#allocation6], %s959
          %s961 = sand.u32 %s156, 1
          %s962 = smul.addr %s961, 8
          %s963 = scalar_lea.vmem [#allocation10], %s962
          %964 = dma.done %s960, 128
        $region68: #{tpu_custom_call.1} parent=63 // pred_fallthru
          _
      $region64: #{tpu_custom_call.1} parent=5 // pred_fallthru
        _
    $region6: #{tpu_custom_call.1} parent=1 // loop_footer
      %s22 = sadd.s32 1, %s18
    $region7: #{tpu_custom_call.1} parent=1 // loop_footer_branch
      %17 = sbr.rel target = $region3
    $region8: #{tpu_custom_call.1} parent=1 // loop_exit
      _
    %965 = vsyncpa [#allocation5], 1
    %s966 = scalar_lea.sflag [#allocation5], 1
    %967 = vsyncpa %s966, 1
    %968 = vsyncpa [#allocation8], 1
    %969 = vsyncpa [#allocation6], 1
    %s970 = scalar_lea.sflag [#allocation6], 1
    %971 = vsyncpa %s970, 1

// kernel: tpu_custom_call.1
$region0: #{tpu_custom_call.1}
  #allocation0 [shape = 'u32[]', space=smem, size = 0x4, offset = 0x4, fixed_abs, tag = 'smem constant byte address 0x4 - core index']
  #allocation1 [shape = 'u32[144,128]{1,0:T(1,128)}', space=vmem, size = 0x12000, scoped, tag = 'internal scratch']
  #allocation2 [shape = 'bf16[8,96]{1,0:T(8,128)(2,1)}', space=vmem, size = 0x800, scoped, tag = 'scratch operand']
  #allocation3 [shape = 'bf16[8,32]{1,0:T(8,128)(2,1)}', space=vmem, size = 0x800, scoped, tag = 'scratch operand']
  %s0 = inlined_call_operand.hbm [shape: bf16[2,8,32], index: 0, kind: input, shape index: {}]
  %s1 = inlined_call_operand.hbm [shape: bf16[32,96], index: 1, kind: input, shape index: {}]
  %s2 = inlined_call_operand.vmem [shape: f32[1,96], index: 2, kind: input, shape index: {}]
  %s3 = inlined_call_operand.hbm [shape: bf16[32,32], index: 3, kind: input, shape index: {}]
  %s4 = inlined_call_operand.vmem [shape: f32[1,32], index: 4, kind: input, shape index: {}]
  %s5 = inlined_call_operand.hbm [shape: f32[2,8,32], index: 5, kind: output, shape index: {}]
  %s6 = sld [smem:[#allocation0]]
  $region69: #{tpu_custom_call.1} parent=0
    _
  %s8 = ssub.s32 1, %s6
  %s9 = scalar_select 0, %s8, %s6
  $region1: #{tpu_custom_call.1} parent=0
    #allocation4 [shape = 'u8[4096]{0}', space=vmem, size = 0x1000, scoped, tag = 'input window, operand 0']
    #allocation5 [shape = 's32[2]{0}', space=sflag, size = 0x8, scoped, tag = 'scoped memory for tpu_custom_call.1']
    #allocation6 [shape = 's32[2]{0}', space=sflag, size = 0x8, scoped, tag = 'scoped memory for tpu_custom_call.1']
    #allocation7 [shape = 'u8[8192]{0}', space=vmem, size = 0x2000, scoped, tag = 'input window, operand 1, single buffered']
    #allocation8 [shape = 's32[1]{0}', space=sflag, size = 0x4, scoped, tag = 'scoped memory for tpu_custom_call.1']
    #allocation9 [shape = 'u8[8192]{0}', space=vmem, size = 0x2000, scoped, tag = 'input window, operand 3, single buffered']
    #allocation10 [shape = 'u8[8192]{0}', space=vmem, size = 0x2000, scoped, tag = 'output window, operand 0']
    %10 = vsyncpa [#allocation5], 0
    %s11 = scalar_lea.sflag [#allocation5], 1
    %12 = vsyncpa %s11, 0
    %13 = vsyncpa [#allocation8], 0
    %14 = vsyncpa [#allocation6], 0
    %s15 = scalar_lea.sflag [#allocation6], 1
    %16 = vsyncpa %s15, 0
    loop: start=0, step=1, limit=4
    $region2: #{tpu_custom_call.1} parent=1 // loop_pre_header
      _
    $region3: #{tpu_custom_call.1} parent=1 // loop_header
      %s18 = sphi 0, %s22
      %p19 = scmp.ge.s32.totalorder %s18, 4
      %s25 = sphi 0, %s37
      %s26 = sphi 0, %s33
      %s27 = sphi 0, %s25
      %s28 = sphi 0, %s26
      %s29 = sphi 0, %s27
      %s30 = sphi 0, %s28
      %s40 = sphi 0, %s42
      %s43 = sphi 0, %s40
      %s44 = sphi 0, %s43
      %s60 = sphi 0, %s44
      %s64 = sphi 0, %s64
      %s66 = sphi 0, %s64
      %s67 = sphi 0, %s66
      %s81 = sphi 0, %s67
      %s85 = sphi 0, %s85
      %s87 = sphi 0, %s85
      %s88 = sphi 0, %s87
      %s102 = sphi 0, %s88
      %s106 = sphi 0, %s106
      %s108 = sphi 0, %s106
      %s109 = sphi 0, %s108
      %s123 = sphi 0, %s109
      %s127 = sphi 0, %s127
      %s129 = sphi 0, %s127
      %s130 = sphi 0, %s129
      %s144 = sphi 0, %s130
      %s152 = sphi 0, %s154
      %s155 = sphi 0, %s152
      %s156 = sphi 0, %s155
      %s172 = sphi 0, %s156
    $region4: #{tpu_custom_call.1} parent=1 // loop_header_branch
      %21 = sbr.rel (%p19) target = $region8
    $region5: #{tpu_custom_call.1} parent=1 // loop_body
      %s23 = ssub.s32 %s18, 1
      %s24 = ssub.s32 %s18, 2
      %s31 = sadd.s32 1, %s26
      %p32 = scmp.ge.s32.totalorder %s31, 1
      %s33 = scalar_select %p32, 0, %s31
      %s34 = sadd.s32 1, %s25
      %s35 = scalar_select %p32, %s34, %s25
      %p36 = scmp.ge.s32.totalorder %s35, 2
      %s37 = scalar_select %p36, 0, %s35
      %s38 = ssub.s32 %s25, %s37
      %p39 = scmp.eq.s32.totalorder %s38, 0
      %s41 = sadd.s32 %s40, 1
      %s42 = scalar_select %p39, %s40, %s41
      %p45 = pneg %p39
      %p46 = scmp.eq.s32.totalorder %s18, 1
      %p47 = por %p45, %p46
      %p48 = scmp.ne.s32.totalorder %s40, %s43
      %p49 = scmp.eq.s32.totalorder %s18, 0
      %p50 = por %p48, %p49
      %p51 = scmp.ne.s32.totalorder %s40, %s43
      %p52 = scmp.eq.s32.totalorder %s23, 1
      %p53 = por %p51, %p52
      %p54 = scmp.ne.s32.totalorder %s43, %s44
      %p55 = scmp.eq.s32.totalorder %s23, 0
      %p56 = por %p54, %p55
      %p57 = scmp.ne.s32.totalorder %s43, %s44
      %p58 = scmp.eq.s32.totalorder %s24, 1
      %p59 = por %p57, %p58
      %p61 = scmp.ne.s32.totalorder %s44, %s60
      %p62 = scmp.eq.s32.totalorder %s24, 0
      %p63 = por %p61, %p62
      %s65 = sadd.s32 %s64, 1
      %p68 = scmp.eq.s32.totalorder %s18, 1
      %p69 = scmp.ne.s32.totalorder %s64, %s66
      %p70 = scmp.eq.s32.totalorder %s18, 0
      %p71 = por %p69, %p70
      %p72 = scmp.ne.s32.totalorder %s64, %s66
      %p73 = scmp.eq.s32.totalorder %s23, 1
      %p74 = por %p72, %p73
      %p75 = scmp.ne.s32.totalorder %s66, %s67
      %p76 = scmp.eq.s32.totalorder %s23, 0
      %p77 = por %p75, %p76
      %p78 = scmp.ne.s32.totalorder %s66, %s67
      %p79 = scmp.eq.s32.totalorder %s24, 1
      %p80 = por %p78, %p79
      %p82 = scmp.ne.s32.totalorder %s67, %s81
      %p83 = scmp.eq.s32.totalorder %s24, 0
      %p84 = por %p82, %p83
      %s86 = sadd.s32 %s85, 1
      %p89 = scmp.eq.s32.totalorder %s18, 1
      %p90 = scmp.ne.s32.totalorder %s85, %s87
      %p91 = scmp.eq.s32.totalorder %s18, 0
      %p92 = por %p90, %p91
      %p93 = scmp.ne.s32.totalorder %s85, %s87
      %p94 = scmp.eq.s32.totalorder %s23, 1
      %p95 = por %p93, %p94
      %p96 = scmp.ne.s32.totalorder %s87, %s88
      %p97 = scmp.eq.s32.totalorder %s23, 0
      %p98 = por %p96, %p97
      %p99 = scmp.ne.s32.totalorder %s87, %s88
      %p100 = scmp.eq.s32.totalorder %s24, 1
      %p101 = por %p99, %p100
      %p103 = scmp.ne.s32.totalorder %s88, %s102
      %p104 = scmp.eq.s32.totalorder %s24, 0
      %p105 = por %p103, %p104
      %s107 = sadd.s32 %s106, 1
      %p110 = scmp.eq.s32.totalorder %s18, 1
      %p111 = scmp.ne.s32.totalorder %s106, %s108
      %p112 = scmp.eq.s32.totalorder %s18, 0
      %p113 = por %p111, %p112
      %p114 = scmp.ne.s32.totalorder %s106, %s108
      %p115 = scmp.eq.s32.totalorder %s23, 1
      %p116 = por %p114, %p115
      %p117 = scmp.ne.s32.totalorder %s108, %s109
      %p118 = scmp.eq.s32.totalorder %s23, 0
      %p119 = por %p117, %p118
      %p120 = scmp.ne.s32.totalorder %s108, %s109
      %p121 = scmp.eq.s32.totalorder %s24, 1
      %p122 = por %p120, %p121
      %p124 = scmp.ne.s32.totalorder %s109, %s123
      %p125 = scmp.eq.s32.totalorder %s24, 0
      %p126 = por %p124, %p125
      %s128 = sadd.s32 %s127, 1
      %p131 = scmp.eq.s32.totalorder %s18, 1
      %p132 = scmp.ne.s32.totalorder %s127, %s129
      %p133 = scmp.eq.s32.totalorder %s18, 0
      %p134 = por %p132, %p133
      %p135 = scmp.ne.s32.totalorder %s127, %s129
      %p136 = scmp.eq.s32.totalorder %s23, 1
      %p137 = por %p135, %p136
      %p138 = scmp.ne.s32.totalorder %s129, %s130
      %p139 = scmp.eq.s32.totalorder %s23, 0
      %p140 = por %p138, %p139
      %p141 = scmp.ne.s32.totalorder %s129, %s130
      %p142 = scmp.eq.s32.totalorder %s24, 1
      %p143 = por %p141, %p142
      %p145 = scmp.ne.s32.totalorder %s130, %s144
      %p146 = scmp.eq.s32.totalorder %s24, 0
      %p147 = por %p145, %p146
      %s148 = ssub.s32 %s25, %s37
      %s149 = ssub.s32 %s26, %s33
      %s150 = sor.u32 %s148, %s149
      %p151 = scmp.eq.s32.totalorder %s150, 0
      %s153 = sadd.s32 %s152, 1
      %s154 = scalar_select %p151, %s152, %s153
      %p157 = pneg %p151
      %p158 = scmp.eq.s32.totalorder %s18, 1
      %p159 = por %p157, %p158
      %p160 = scmp.ne.s32.totalorder %s152, %s155
      %p161 = scmp.eq.s32.totalorder %s18, 0
      %p162 = por %p160, %p161
      %p163 = scmp.ne.s32.totalorder %s152, %s155
      %p164 = scmp.eq.s32.totalorder %s23, 1
      %p165 = por %p163, %p164
      %p166 = scmp.ne.s32.totalorder %s155, %s156
      %p167 = scmp.eq.s32.totalorder %s23, 0
      %p168 = por %p166, %p167
      %p169 = scmp.ne.s32.totalorder %s155, %s156
      %p170 = scmp.eq.s32.totalorder %s24, 1
      %p171 = por %p169, %p170
      %p173 = scmp.ne.s32.totalorder %s156, %s172
      %p174 = scmp.eq.s32.totalorder %s24, 0
      %p175 = por %p173, %p174
      %p176 = scmp.le.s32.totalorder 1, %s18
      %p177 = scmp.lt.s32.totalorder %s18, 3
      %p178 = pnand %p176, %p177
      %p179 = pneg %p178
      // Predicated region
      $region9: #{tpu_custom_call.1} parent=5 // pred_check
        _
      $region10: #{tpu_custom_call.1} parent=5 // pred_check_branch
        %181 = sbr.rel (%p178) target = $region12
      $region11: #{tpu_custom_call.1} parent=5 // pred_region
        %s182 = ssub.s32 %s18, 1
        // Predicated region
        $region13: #{tpu_custom_call.1} parent=11 // pred_check
          %p183 = pneg %p77
        $region14: #{tpu_custom_call.1} parent=11 // pred_check_branch
          %185 = sbr.rel (%p183) target = $region16
        $region15: #{tpu_custom_call.1} parent=11 // pred_region
          %s187 = ssub.s32 256, 256
          %188 = vsyncadd [#allocation8], %s187
          %s189 = sshll.u32 [#allocation7], 4
          %s190 = int_to_ptr.vmem [resolvable:$true] %s189
          %195 = dma.hbm_to_vmem [thread:$0]  %s1, 256, %s190, [#allocation8], 64, 64, 4
        $region16: #{tpu_custom_call.1} parent=11 // pred_fallthru
          _
        // Predicated region
        $region17: #{tpu_custom_call.1} parent=11 // pred_check
          %p196 = pneg %p98
        $region18: #{tpu_custom_call.1} parent=11 // pred_check_branch
          %198 = sbr.rel (%p196) target = $region20
        $region19: #{tpu_custom_call.1} parent=11 // pred_region
          _
        $region20: #{tpu_custom_call.1} parent=11 // pred_fallthru
          _
        // Predicated region
        $region21: #{tpu_custom_call.1} parent=11 // pred_check
          %p199 = pneg %p119
        $region22: #{tpu_custom_call.1} parent=11 // pred_check_branch
          %201 = sbr.rel (%p199) target = $region24
        $region23: #{tpu_custom_call.1} parent=11 // pred_region
          %s203 = ssub.s32 256, 256
          %204 = vsyncadd [#allocation8], %s203
          %s205 = sshll.u32 [#allocation9], 4
          %s206 = int_to_ptr.vmem [resolvable:$true] %s205
          %211 = dma.hbm_to_vmem [thread:$0]  %s3, 256, %s206, [#allocation8], 64, 64, 4
        $region24: #{tpu_custom_call.1} parent=11 // pred_fallthru
          _
        // Predicated region
        $region25: #{tpu_custom_call.1} parent=11 // pred_check
          %p212 = pneg %p140
        $region26: #{tpu_custom_call.1} parent=11 // pred_check_branch
          %214 = sbr.rel (%p212) target = $region28
        $region27: #{tpu_custom_call.1} parent=11 // pred_region
          _
        $region28: #{tpu_custom_call.1} parent=11 // pred_fallthru
          _
      $region12: #{tpu_custom_call.1} parent=5 // pred_fallthru
        _
      %p215 = scmp.lt.s32.totalorder %s18, 2
      // Predicated region
      $region29: #{tpu_custom_call.1} parent=5 // pred_check
        %p216 = pneg %p215
      $region30: #{tpu_custom_call.1} parent=5 // pred_check_branch
        %218 = sbr.rel (%p216) target = $region32
      $region31: #{tpu_custom_call.1} parent=5 // pred_region
        // Predicated region
        $region33: #{tpu_custom_call.1} parent=31 // pred_check
          %p219 = pneg %p50
        $region34: #{tpu_custom_call.1} parent=31 // pred_check_branch
          %221 = sbr.rel (%p219) target = $region36
        $region35: #{tpu_custom_call.1} parent=31 // pred_region
          %s222 = sand.u32 %s40, 1
          %s223 = scalar_lea.sflag [#allocation5], %s222
          %s224 = sand.u32 %s40, 1
          %s225 = smul.addr %s224, 4
          %s226 = scalar_lea.vmem [#allocation4], %s225
          %s228 = ssub.s32 64, 64
          %229 = vsyncadd %s223, %s228
          %s230 = smul.addr %s25, 64
          %s231 = scalar_lea.hbm %s0, %s230
          %s233 = sshll.u32 %s226, 4
          %s234 = int_to_ptr.vmem [resolvable:$true] %s233
          %236 = dma.hbm_to_vmem [thread:$0]  %s231, 64, %s234, %s223
        $region36: #{tpu_custom_call.1} parent=31 // pred_fallthru
          _
      $region32: #{tpu_custom_call.1} parent=5 // pred_fallthru
        _
      %p237 = scmp.le.s32.totalorder 1, %s18
      %p238 = scmp.lt.s32.totalorder %s18, 3
      %p239 = pnand %p237, %p238
      %p240 = pneg %p239
      // Predicated region
      $region37: #{tpu_custom_call.1} parent=5 // pred_check
        _
      $region38: #{tpu_custom_call.1} parent=5 // pred_check_branch
        %242 = sbr.rel (%p239) target = $region40
      $region39: #{tpu_custom_call.1} parent=5 // pred_region
        %s243 = ssub.s32 %s18, 1
        %s244 = sand.u32 %s43, 1
        %s245 = scalar_lea.sflag [#allocation5], %s244
        %s246 = sand.u32 %s43, 1
        %s247 = smul.addr %s246, 4
        %s248 = scalar_lea.vmem [#allocation4], %s247
        // Predicated region
        $region41: #{tpu_custom_call.1} parent=39 // pred_check
          %p249 = pneg %p56
        $region42: #{tpu_custom_call.1} parent=39 // pred_check_branch
          %251 = sbr.rel (%p249) target = $region44
        $region43: #{tpu_custom_call.1} parent=39 // pred_region
          %252 = dma.done %s245, 64
        $region44: #{tpu_custom_call.1} parent=39 // pred_fallthru
          _
        // Predicated region
        $region45: #{tpu_custom_call.1} parent=39 // pred_check
          %p253 = pneg %p77
        $region46: #{tpu_custom_call.1} parent=39 // pred_check_branch
          %255 = sbr.rel (%p253) target = $region48
        $region47: #{tpu_custom_call.1} parent=39 // pred_region
          %256 = dma.done [#allocation8], 256
        $region48: #{tpu_custom_call.1} parent=39 // pred_fallthru
          _
        // Predicated region
        $region49: #{tpu_custom_call.1} parent=39 // pred_check
          %p257 = pneg %p119
        $region50: #{tpu_custom_call.1} parent=39 // pred_check_branch
          %259 = sbr.rel (%p257) target = $region52
        $region51: #{tpu_custom_call.1} parent=39 // pred_region
          %260 = dma.done [#allocation8], 256
        $region52: #{tpu_custom_call.1} parent=39 // pred_fallthru
          _
        %s261 = sand.u32 %s43, 1
        %s262 = scalar_lea.sflag [#allocation5], %s261
        %s263 = sand.u32 %s43, 1
        %s264 = smul.addr %s263, 4
        %s265 = scalar_lea.vmem [#allocation4], %s264
        %p266 = pneg %p56
        %p267 = pneg %p53
        %p268 = pneg %p77
        %p269 = pneg %p74
        %p270 = pneg %p98
        %p271 = pneg %p95
        %p272 = pneg %p119
        %p273 = pneg %p116
        %p274 = pneg %p140
        %p275 = pneg %p137
        %p276 = pneg %p168
        %p277 = pneg %p165
        %s278 = sand.u32 %s155, 1
        %s279 = scalar_lea.sflag [#allocation6], %s278
        %s280 = sand.u32 %s155, 1
        %s281 = smul.addr %s280, 8
        %s282 = scalar_lea.vmem [#allocation10], %s281
        %p284 = scmp.eq.s32.totalorder %s28, 0
        // Predicated region
        $region53: #{tpu_custom_call.1} parent=39 // pred_check
          %p285 = pneg %p284
        $region54: #{tpu_custom_call.1} parent=39 // pred_check_branch
          %287 = sbr.rel (%p285) target = $region56
        $region55: #{tpu_custom_call.1} parent=39 // pred_region
          %v288 = vld [vmem:[%s248] sm:$0xf]
          %v289 = vld [vmem:[#allocation7] sm:$0xf]
          %v290 = vld [vmem:[#allocation7 + $0x4] sm:$0xf]
          %v291 = vld [vmem:[#allocation7 + $0x8] sm:$0xf]
          %v292 = vld [vmem:[#allocation7 + $0xc] sm:$0xf]
          %v293 = vld [vmem:[%s2] sm:$0x1]
          %v295 = vlaneseq
          %v296 = vshrl.u32 %v295, 7
          %v297 = vsub.s32 0, %v296
          %v298 = vrot.slane %v293, %v297
          %v304 = vunpack.c.l.b16 %v289
          %v305 = vunpack.c.l.b16 %v290
          %v306 = vunpack.c.l.b16 %v291
          %v307 = vunpack.c.l.b16 %v292
          %v308 = vpack.c.b16 %v305, %v304
          %v309 = vpack.c.b16 %v307, %v306
          %vm312 = vcmask 261120
          %v314 = vsel %vm312, %v288, 0
          %316 = vmatprep.subr.bf16.mxu0 0
          %317 = vmatpush1.bf16.msra.mxu0 0
          %318 = vmatprep.subr.bf16.mxu0 0
          %319 = vmatpush1.bf16.msra.mxu0 0
          %320 = vmatprep.subr.bf16.mxu0 0
          %321 = vmatpush1.bf16.msra.mxu0 0
          %322 = vmatprep.subr.bf16.mxu0 0
          %323 = vmatpush1.bf16.msra.mxu0 0
          %324 = vmatprep.subr.bf16.mxu0 0
          %325 = vmatpush1.bf16.msra.mxu0 0
          %326 = vmatprep.subr.bf16.mxu0 0
          %327 = vmatpush1.bf16.msra.mxu0 0
          %328 = vmatprep.subr.bf16.mxu0 0
          %329 = vmatpush1.bf16.msra.mxu0 %v309
          %330 = vmatprep.subr.bf16.mxu0 0
          %331 = vmatpush1.bf16.msra.mxu0 %v308
          %332 = vmatprep.subr.bf16.mxu0 0
          %333 = vmatpush2.bf16.msra.mxu0 0
          %334 = vmatprep.subr.bf16.mxu0 0
          %335 = vmatpush2.bf16.msra.mxu0 0
          %336 = vmatprep.subr.bf16.mxu0 0
          %337 = vmatpush2.bf16.msra.mxu0 0
          %338 = vmatprep.subr.bf16.mxu0 0
          %339 = vmatpush2.bf16.msra.mxu0 0
          %340 = vmatprep.subr.bf16.mxu0 0
          %341 = vmatpush2.bf16.msra.mxu0 0
          %342 = vmatprep.subr.bf16.mxu0 0
          %343 = vmatpush2.bf16.msra.mxu0 0
          %344 = vmatprep.subr.bf16.mxu0 0
          %345 = vmatpush2.bf16.msra.mxu0 0
          %346 = vmatprep.subr.bf16.mxu0 0
          %347 = vmatpush2.bf16.msra.mxu0 0
          %348 = vmatprep.mubr.bf16.mxu0 0
          %349 = vmatmul.mubr.bf16.gmra.mxu0 %v314
          %v350 = vpop.f32.mrf.mxu0
          %v351 = vadd.f32 %v298, %v350
          %v352 = vpop.f32.mrf.mxu0
          %v353 = vpop.f32.mrf.mxu0
          %v354 = vpop.f32.mrf.mxu0
          %355 = vdwg.mxu0
          %v356 = vpack.c.bf16 %v351, %v351
          %vm357 = vcmask 781312
          %358 = vst.msk [vmem:[#allocation2] sm:$0xf] %vm357, %v356
        $region56: #{tpu_custom_call.1} parent=39 // pred_fallthru
          _
        %s359 = smul.u32 %s28, 8
        %s360 = sshra.s32 %s359, 3
        %s361 = sand.u32 %s359, 7
        %s362 = smul.addr %s360, 4
        %s363 = scalar_lea.vmem [#allocation2], %s362
        %v364 = vld [vmem:[%s363] sm:$0xf]
        %v365 = vld [vmem:[#allocation2] sm:$0xf]
        %v367 = vunpack.c.l.b16 %v365
        %v368 = vpack.c.b16 %v367, %v367
        %369 = vrot.lane.b32.xlu0 %v368, 96
        %v370 = vpop.permute.xlu0 %369
        %vm371 = vcmask 64512
        %v373 = vsel %vm371, %v364, 0
        %v376 = vsel %vm371, %v370, 0
        %378 = vmatprep.subr.bf16.mxu0 0
        %379 = vmatpush1.bf16.xpose.msra.mxu0 0
        %380 = vmatprep.subr.bf16.mxu0 0
        %381 = vmatpush1.bf16.xpose.msra.mxu0 0
        %382 = vmatprep.subr.bf16.mxu0 0
        %383 = vmatpush1.bf16.xpose.msra.mxu0 0
        %384 = vmatprep.subr.bf16.mxu0 0
        %385 = vmatpush1.bf16.xpose.msra.mxu0 0
        %386 = vmatprep.subr.bf16.mxu0 0
        %387 = vmatpush1.bf16.xpose.msra.mxu0 0
        %388 = vmatprep.subr.bf16.mxu0 0
        %389 = vmatpush1.bf16.xpose.msra.mxu0 0
        %390 = vmatprep.subr.bf16.mxu0 0
        %391 = vmatpush1.bf16.xpose.msra.mxu0 0
        %392 = vmatprep.subr.bf16.mxu0 0
        %393 = vmatpush1.bf16.xpose.msra.mxu0 %v376
        %394 = vmatprep.subr.bf16.mxu0 0
        %395 = vmatpush2.bf16.xpose.msra.mxu0 0
        %396 = vmatprep.subr.bf16.mxu0 0
        %397 = vmatpush2.bf16.xpose.msra.mxu0 0
        %398 = vmatprep.subr.bf16.mxu0 0
        %399 = vmatpush2.bf16.xpose.msra.mxu0 0
        %400 = vmatprep.subr.bf16.mxu0 0
        %401 = vmatpush2.bf16.xpose.msra.mxu0 0
        %402 = vmatprep.subr.bf16.mxu0 0
        %403 = vmatpush2.bf16.xpose.msra.mxu0 0
        %404 = vmatprep.subr.bf16.mxu0 0
        %405 = vmatpush2.bf16.xpose.msra.mxu0 0
        %406 = vmatprep.subr.bf16.mxu0 0
        %407 = vmatpush2.bf16.xpose.msra.mxu0 0
        %408 = vmatprep.subr.bf16.mxu0 0
        %409 = vmatpush2.bf16.xpose.msra.mxu0 0
        %410 = vmatprep.mubr.bf16.mxu0 0
        %411 = vmatmul.mubr.bf16.gmra.mxu0 %v373
        %v412 = vpop.f32.mrf.mxu0
        %v413 = vadd.f32 0.0, %v412
        %v414 = vpop.f32.mrf.mxu0
        %v415 = vpop.f32.mrf.mxu0
        %v416 = vpop.f32.mrf.mxu0
        %417 = vdwg.mxu0
        %v418 = vsel %vm371, %v413, -inf
        %419 = vmax.xlane.f32.xlu0 %v418
        %v420 = vpop.xlane.xlu0 %419
        %v421 = vsub.f32 %v413, %v420
        %v422 = vmul.f32 %v421, 1.442695
        %v423 = vpow.pop %v422
        %v424 = vsel %vm371, %v423, 0.0
        %425 = vadd.xlane.f32.xlu0 %v424
        %v426 = vpop.xlane.xlu0 %425
        %v427 = vrcp.pop %v426
        %v428 = vmul.f32 %v423, %v427
        %v429 = vpack.c.bf16 %v428, %v428
        %430 = vrot.lane.b32.xlu0 %v368, 64
        %v431 = vpop.permute.xlu0 %430
        %v433 = vsel %vm371, %v429, 0
        %vm435 = vcmask 1043456
        %v437 = vsel %vm435, %v431, 0
        %439 = vmatprep.subr.bf16.mxu0 0
        %440 = vmatpush1.bf16.msra.mxu0 0
        %441 = vmatprep.subr.bf16.mxu0 0
        %442 = vmatpush1.bf16.msra.mxu0 0
        %443 = vmatprep.subr.bf16.mxu0 0
        %444 = vmatpush1.bf16.msra.mxu0 0
        %445 = vmatprep.subr.bf16.mxu0 0
        %446 = vmatpush1.bf16.msra.mxu0 0
        %447 = vmatprep.subr.bf16.mxu0 0
        %448 = vmatpush1.bf16.msra.mxu0 0
        %449 = vmatprep.subr.bf16.mxu0 0
        %450 = vmatpush1.bf16.msra.mxu0 0
        %451 = vmatprep.subr.bf16.mxu0 0
        %452 = vmatpush1.bf16.msra.mxu0 0
        %453 = vmatprep.subr.bf16.mxu0 0
        %454 = vmatpush1.bf16.msra.mxu0 %v437
        %455 = vmatprep.subr.bf16.mxu0 0
        %456 = vmatpush2.bf16.msra.mxu0 0
        %457 = vmatprep.subr.bf16.mxu0 0
        %458 = vmatpush2.bf16.msra.mxu0 0
        %459 = vmatprep.subr.bf16.mxu0 0
        %460 = vmatpush2.bf16.msra.mxu0 0
        %461 = vmatprep.subr.bf16.mxu0 0
        %462 = vmatpush2.bf16.msra.mxu0 0
        %463 = vmatprep.subr.bf16.mxu0 0
        %464 = vmatpush2.bf16.msra.mxu0 0
        %465 = vmatprep.subr.bf16.mxu0 0
        %466 = vmatpush2.bf16.msra.mxu0 0
        %467 = vmatprep.subr.bf16.mxu0 0
        %468 = vmatpush2.bf16.msra.mxu0 0
        %469 = vmatprep.subr.bf16.mxu0 0
        %470 = vmatpush2.bf16.msra.mxu0 0
        %471 = vmatprep.mubr.bf16.mxu0 0
        %472 = vmatmul.mubr.bf16.gmra.mxu0 %v433
        %v473 = vpop.f32.mrf.mxu0
        %v474 = vadd.f32 0.0, %v473
        %v475 = vpop.f32.mrf.mxu0
        %v476 = vpop.f32.mrf.mxu0
        %v477 = vpop.f32.mrf.mxu0
        %478 = vdwg.mxu0
        %v479 = vpack.c.bf16 %v474, %v474
        %vm480 = vcmask 60416
        %481 = vst.msk [vmem:[#allocation3] sm:$0xf] %vm480, %v479
        %v482 = vld [vmem:[%s363] sm:$0xf]
        %v483 = vld [vmem:[#allocation2] sm:$0xf]
        %v485 = vunpack.c.l.b16 %v482
        %v486 = vpack.c.b16 %v485, %v485
        %487 = vrot.lane.b32.xlu0 %v486, 120
        %v488 = vpop.permute.xlu0 %487
        %v490 = vunpack.c.l.b16 %v483
        %v491 = vpack.c.b16 %v490, %v490
        %492 = vrot.lane.b32.xlu0 %v491, 88
        %v493 = vpop.permute.xlu0 %492
        %v495 = vsel %vm371, %v488, 0
        %v498 = vsel %vm371, %v493, 0
        %500 = vmatprep.subr.bf16.mxu0 0
        %501 = vmatpush1.bf16.xpose.msra.mxu0 0
        %502 = vmatprep.subr.bf16.mxu0 0
        %503 = vmatpush1.bf16.xpose.msra.mxu0 0
        %504 = vmatprep.subr.bf16.mxu0 0
        %505 = vmatpush1.bf16.xpose.msra.mxu0 0
        %506 = vmatprep.subr.bf16.mxu0 0
        %507 = vmatpush1.bf16.xpose.msra.mxu0 0
        %508 = vmatprep.subr.bf16.mxu0 0
        %509 = vmatpush1.bf16.xpose.msra.mxu0 0
        %510 = vmatprep.subr.bf16.mxu0 0
        %511 = vmatpush1.bf16.xpose.msra.mxu0 0
        %512 = vmatprep.subr.bf16.mxu0 0
        %513 = vmatpush1.bf16.xpose.msra.mxu0 0
        %514 = vmatprep.subr.bf16.mxu0 0
        %515 = vmatpush1.bf16.xpose.msra.mxu0 %v498
        %516 = vmatprep.subr.bf16.mxu0 0
        %517 = vmatpush2.bf16.xpose.msra.mxu0 0
        %518 = vmatprep.subr.bf16.mxu0 0
        %519 = vmatpush2.bf16.xpose.msra.mxu0 0
        %520 = vmatprep.subr.bf16.mxu0 0
        %521 = vmatpush2.bf16.xpose.msra.mxu0 0
        %522 = vmatprep.subr.bf16.mxu0 0
        %523 = vmatpush2.bf16.xpose.msra.mxu0 0
        %524 = vmatprep.subr.bf16.mxu0 0
        %525 = vmatpush2.bf16.xpose.msra.mxu0 0
        %526 = vmatprep.subr.bf16.mxu0 0
        %527 = vmatpush2.bf16.xpose.msra.mxu0 0
        %528 = vmatprep.subr.bf16.mxu0 0
        %529 = vmatpush2.bf16.xpose.msra.mxu0 0
        %530 = vmatprep.subr.bf16.mxu0 0
        %531 = vmatpush2.bf16.xpose.msra.mxu0 0
        %532 = vmatprep.mubr.bf16.mxu0 0
        %533 = vmatmul.mubr.bf16.gmra.mxu0 %v495
        %v534 = vpop.f32.mrf.mxu0
        %v535 = vadd.f32 0.0, %v534
        %v536 = vpop.f32.mrf.mxu0
        %v537 = vpop.f32.mrf.mxu0
        %v538 = vpop.f32.mrf.mxu0
        %539 = vdwg.mxu0
        %v540 = vsel %vm371, %v535, -inf
        %541 = vmax.xlane.f32.xlu0 %v540
        %v542 = vpop.xlane.xlu0 %541
        %v543 = vsub.f32 %v535, %v542
        %v544 = vmul.f32 %v543, 1.442695
        %v545 = vpow.pop %v544
        %v546 = vsel %vm371, %v545, 0.0
        %547 = vadd.xlane.f32.xlu0 %v546
        %v548 = vpop.xlane.xlu0 %547
        %v549 = vrcp.pop %v548
        %v550 = vmul.f32 %v545, %v549
        %v551 = vpack.c.bf16 %v550, %v550
        %552 = vrot.lane.b32.xlu0 %v491, 56
        %v553 = vpop.permute.xlu0 %552
        %v555 = vsel %vm371, %v551, 0
        %v558 = vsel %vm435, %v553, 0
        %560 = vmatprep.subr.bf16.mxu0 0
        %561 = vmatpush1.bf16.msra.mxu0 0
        %562 = vmatprep.subr.bf16.mxu0 0
        %563 = vmatpush1.bf16.msra.mxu0 0
        %564 = vmatprep.subr.bf16.mxu0 0
        %565 = vmatpush1.bf16.msra.mxu0 0
        %566 = vmatprep.subr.bf16.mxu0 0
        %567 = vmatpush1.bf16.msra.mxu0 0
        %568 = vmatprep.subr.bf16.mxu0 0
        %569 = vmatpush1.bf16.msra.mxu0 0
        %570 = vmatprep.subr.bf16.mxu0 0
        %571 = vmatpush1.bf16.msra.mxu0 0
        %572 = vmatprep.subr.bf16.mxu0 0
        %573 = vmatpush1.bf16.msra.mxu0 0
        %574 = vmatprep.subr.bf16.mxu0 0
        %575 = vmatpush1.bf16.msra.mxu0 %v558
        %576 = vmatprep.subr.bf16.mxu0 0
        %577 = vmatpush2.bf16.msra.mxu0 0
        %578 = vmatprep.subr.bf16.mxu0 0
        %579 = vmatpush2.bf16.msra.mxu0 0
        %580 = vmatprep.subr.bf16.mxu0 0
        %581 = vmatpush2.bf16.msra.mxu0 0
        %582 = vmatprep.subr.bf16.mxu0 0
        %583 = vmatpush2.bf16.msra.mxu0 0
        %584 = vmatprep.subr.bf16.mxu0 0
        %585 = vmatpush2.bf16.msra.mxu0 0
        %586 = vmatprep.subr.bf16.mxu0 0
        %587 = vmatpush2.bf16.msra.mxu0 0
        %588 = vmatprep.subr.bf16.mxu0 0
        %589 = vmatpush2.bf16.msra.mxu0 0
        %590 = vmatprep.subr.bf16.mxu0 0
        %591 = vmatpush2.bf16.msra.mxu0 0
        %592 = vmatprep.mubr.bf16.mxu0 0
        %593 = vmatmul.mubr.bf16.gmra.mxu0 %v555
        %v594 = vpop.f32.mrf.mxu0
        %v595 = vadd.f32 0.0, %v594
        %v596 = vpop.f32.mrf.mxu0
        %v597 = vpop.f32.mrf.mxu0
        %v598 = vpop.f32.mrf.mxu0
        %599 = vdwg.mxu0
        %v600 = vpack.c.bf16 %v595, %v595
        %v602 = vunpack.c.l.b16 %v600
        %v603 = vpack.c.b16 %v602, %v602
        %604 = vrot.lane.b32.xlu0 %v603, 8
        %v605 = vpop.permute.xlu0 %604
        %vm607 = vcmask 126016
        %608 = vst.msk [vmem:[#allocation3] sm:$0xf] %vm607, %v605
        %v609 = vld [vmem:[%s363] sm:$0xf]
        %v610 = vld [vmem:[#allocation2] sm:$0xf]
        %v612 = vunpack.c.l.b16 %v609
        %v613 = vpack.c.b16 %v612, %v612
        %614 = vrot.lane.b32.xlu0 %v613, 112
        %v615 = vpop.permute.xlu0 %614
        %v617 = vunpack.c.l.b16 %v610
        %v618 = vpack.c.b16 %v617, %v617
        %619 = vrot.lane.b32.xlu0 %v618, 80
        %v620 = vpop.permute.xlu0 %619
        %v622 = vsel %vm371, %v615, 0
        %v625 = vsel %vm371, %v620, 0
        %627 = vmatprep.subr.bf16.mxu0 0
        %628 = vmatpush1.bf16.xpose.msra.mxu0 0
        %629 = vmatprep.subr.bf16.mxu0 0
        %630 = vmatpush1.bf16.xpose.msra.mxu0 0
        %631 = vmatprep.subr.bf16.mxu0 0
        %632 = vmatpush1.bf16.xpose.msra.mxu0 0
        %633 = vmatprep.subr.bf16.mxu0 0
        %634 = vmatpush1.bf16.xpose.msra.mxu0 0
        %635 = vmatprep.subr.bf16.mxu0 0
        %636 = vmatpush1.bf16.xpose.msra.mxu0 0
        %637 = vmatprep.subr.bf16.mxu0 0
        %638 = vmatpush1.bf16.xpose.msra.mxu0 0
        %639 = vmatprep.subr.bf16.mxu0 0
        %640 = vmatpush1.bf16.xpose.msra.mxu0 0
        %641 = vmatprep.subr.bf16.mxu0 0
        %642 = vmatpush1.bf16.xpose.msra.mxu0 %v625
        %643 = vmatprep.subr.bf16.mxu0 0
        %644 = vmatpush2.bf16.xpose.msra.mxu0 0
        %645 = vmatprep.subr.bf16.mxu0 0
        %646 = vmatpush2.bf16.xpose.msra.mxu0 0
        %647 = vmatprep.subr.bf16.mxu0 0
        %648 = vmatpush2.bf16.xpose.msra.mxu0 0
        %649 = vmatprep.subr.bf16.mxu0 0
        %650 = vmatpush2.bf16.xpose.msra.mxu0 0
        %651 = vmatprep.subr.bf16.mxu0 0
        %652 = vmatpush2.bf16.xpose.msra.mxu0 0
        %653 = vmatprep.subr.bf16.mxu0 0
        %654 = vmatpush2.bf16.xpose.msra.mxu0 0
        %655 = vmatprep.subr.bf16.mxu0 0
        %656 = vmatpush2.bf16.xpose.msra.mxu0 0
        %657 = vmatprep.subr.bf16.mxu0 0
        %658 = vmatpush2.bf16.xpose.msra.mxu0 0
        %659 = vmatprep.mubr.bf16.mxu0 0
        %660 = vmatmul.mubr.bf16.gmra.mxu0 %v622
        %v661 = vpop.f32.mrf.mxu0
        %v662 = vadd.f32 0.0, %v661
        %v663 = vpop.f32.mrf.mxu0
        %v664 = vpop.f32.mrf.mxu0
        %v665 = vpop.f32.mrf.mxu0
        %666 = vdwg.mxu0
        %v667 = vsel %vm371, %v662, -inf
        %668 = vmax.xlane.f32.xlu0 %v667
        %v669 = vpop.xlane.xlu0 %668
        %v670 = vsub.f32 %v662, %v669
        %v671 = vmul.f32 %v670, 1.442695
        %v672 = vpow.pop %v671
        %v673 = vsel %vm371, %v672, 0.0
        %674 = vadd.xlane.f32.xlu0 %v673
        %v675 = vpop.xlane.xlu0 %674
        %v676 = vrcp.pop %v675
        %v677 = vmul.f32 %v672, %v676
        %v678 = vpack.c.bf16 %v677, %v677
        %679 = vrot.lane.b32.xlu0 %v618, 48
        %v680 = vpop.permute.xlu0 %679
        %v682 = vsel %vm371, %v678, 0
        %v685 = vsel %vm435, %v680, 0
        %687 = vmatprep.subr.bf16.mxu0 0
        %688 = vmatpush1.bf16.msra.mxu0 0
        %689 = vmatprep.subr.bf16.mxu0 0
        %690 = vmatpush1.bf16.msra.mxu0 0
        %691 = vmatprep.subr.bf16.mxu0 0
        %692 = vmatpush1.bf16.msra.mxu0 0
        %693 = vmatprep.subr.bf16.mxu0 0
        %694 = vmatpush1.bf16.msra.mxu0 0
        %695 = vmatprep.subr.bf16.mxu0 0
        %696 = vmatpush1.bf16.msra.mxu0 0
        %697 = vmatprep.subr.bf16.mxu0 0
        %698 = vmatpush1.bf16.msra.mxu0 0
        %699 = vmatprep.subr.bf16.mxu0 0
        %700 = vmatpush1.bf16.msra.mxu0 0
        %701 = vmatprep.subr.bf16.mxu0 0
        %702 = vmatpush1.bf16.msra.mxu0 %v685
        %703 = vmatprep.subr.bf16.mxu0 0
        %704 = vmatpush2.bf16.msra.mxu0 0
        %705 = vmatprep.subr.bf16.mxu0 0
        %706 = vmatpush2.bf16.msra.mxu0 0
        %707 = vmatprep.subr.bf16.mxu0 0
        %708 = vmatpush2.bf16.msra.mxu0 0
        %709 = vmatprep.subr.bf16.mxu0 0
        %710 = vmatpush2.bf16.msra.mxu0 0
        %711 = vmatprep.subr.bf16.mxu0 0
        %712 = vmatpush2.bf16.msra.mxu0 0
        %713 = vmatprep.subr.bf16.mxu0 0
        %714 = vmatpush2.bf16.msra.mxu0 0
        %715 = vmatprep.subr.bf16.mxu0 0
        %716 = vmatpush2.bf16.msra.mxu0 0
        %717 = vmatprep.subr.bf16.mxu0 0
        %718 = vmatpush2.bf16.msra.mxu0 0
        %719 = vmatprep.mubr.bf16.mxu0 0
        %720 = vmatmul.mubr.bf16.gmra.mxu0 %v682
        %v721 = vpop.f32.mrf.mxu0
        %v722 = vadd.f32 0.0, %v721
        %v723 = vpop.f32.mrf.mxu0
        %v724 = vpop.f32.mrf.mxu0
        %v725 = vpop.f32.mrf.mxu0
        %726 = vdwg.mxu0
        %v727 = vpack.c.bf16 %v722, %v722
        %v729 = vunpack.c.l.b16 %v727
        %v730 = vpack.c.b16 %v729, %v729
        %731 = vrot.lane.b32.xlu0 %v730, 16
        %v732 = vpop.permute.xlu0 %731
        %vm734 = vcmask 191616
        %735 = vst.msk [vmem:[#allocation3] sm:$0xf] %vm734, %v732
        %v736 = vld [vmem:[%s363] sm:$0xf]
        %v737 = vld [vmem:[#allocation2] sm:$0xf]
        %v739 = vunpack.c.l.b16 %v736
        %v740 = vpack.c.b16 %v739, %v739
        %741 = vrot.lane.b32.xlu0 %v740, 104
        %v742 = vpop.permute.xlu0 %741
        %v744 = vunpack.c.l.b16 %v737
        %v745 = vpack.c.b16 %v744, %v744
        %746 = vrot.lane.b32.xlu0 %v745, 72
        %v747 = vpop.permute.xlu0 %746
        %v749 = vsel %vm371, %v742, 0
        %v752 = vsel %vm371, %v747, 0
        %754 = vmatprep.subr.bf16.mxu0 0
        %755 = vmatpush1.bf16.xpose.msra.mxu0 0
        %756 = vmatprep.subr.bf16.mxu0 0
        %757 = vmatpush1.bf16.xpose.msra.mxu0 0
        %758 = vmatprep.subr.bf16.mxu0 0
        %759 = vmatpush1.bf16.xpose.msra.mxu0 0
        %760 = vmatprep.subr.bf16.mxu0 0
        %761 = vmatpush1.bf16.xpose.msra.mxu0 0
        %762 = vmatprep.subr.bf16.mxu0 0
        %763 = vmatpush1.bf16.xpose.msra.mxu0 0
        %764 = vmatprep.subr.bf16.mxu0 0
        %765 = vmatpush1.bf16.xpose.msra.mxu0 0
        %766 = vmatprep.subr.bf16.mxu0 0
        %767 = vmatpush1.bf16.xpose.msra.mxu0 0
        %768 = vmatprep.subr.bf16.mxu0 0
        %769 = vmatpush1.bf16.xpose.msra.mxu0 %v752
        %770 = vmatprep.subr.bf16.mxu0 0
        %771 = vmatpush2.bf16.xpose.msra.mxu0 0
        %772 = vmatprep.subr.bf16.mxu0 0
        %773 = vmatpush2.bf16.xpose.msra.mxu0 0
        %774 = vmatprep.subr.bf16.mxu0 0
        %775 = vmatpush2.bf16.xpose.msra.mxu0 0
        %776 = vmatprep.subr.bf16.mxu0 0
        %777 = vmatpush2.bf16.xpose.msra.mxu0 0
        %778 = vmatprep.subr.bf16.mxu0 0
        %779 = vmatpush2.bf16.xpose.msra.mxu0 0
        %780 = vmatprep.subr.bf16.mxu0 0
        %781 = vmatpush2.bf16.xpose.msra.mxu0 0
        %782 = vmatprep.subr.bf16.mxu0 0
        %783 = vmatpush2.bf16.xpose.msra.mxu0 0
        %784 = vmatprep.subr.bf16.mxu0 0
        %785 = vmatpush2.bf16.xpose.msra.mxu0 0
        %786 = vmatprep.mubr.bf16.mxu0 0
        %787 = vmatmul.mubr.bf16.gmra.mxu0 %v749
        %v788 = vpop.f32.mrf.mxu0
        %v789 = vadd.f32 0.0, %v788
        %v790 = vpop.f32.mrf.mxu0
        %v791 = vpop.f32.mrf.mxu0
        %v792 = vpop.f32.mrf.mxu0
        %793 = vdwg.mxu0
        %v794 = vsel %vm371, %v789, -inf
        %795 = vmax.xlane.f32.xlu0 %v794
        %v796 = vpop.xlane.xlu0 %795
        %v797 = vsub.f32 %v789, %v796
        %v798 = vmul.f32 %v797, 1.442695
        %v799 = vpow.pop %v798
        %v800 = vsel %vm371, %v799, 0.0
        %801 = vadd.xlane.f32.xlu0 %v800
        %v802 = vpop.xlane.xlu0 %801
        %v803 = vrcp.pop %v802
        %v804 = vmul.f32 %v799, %v803
        %v805 = vpack.c.bf16 %v804, %v804
        %806 = vrot.lane.b32.xlu0 %v745, 40
        %v807 = vpop.permute.xlu0 %806
        %v809 = vsel %vm371, %v805, 0
        %v812 = vsel %vm435, %v807, 0
        %814 = vmatprep.subr.bf16.mxu0 0
        %815 = vmatpush1.bf16.msra.mxu0 0
        %816 = vmatprep.subr.bf16.mxu0 0
        %817 = vmatpush1.bf16.msra.mxu0 0
        %818 = vmatprep.subr.bf16.mxu0 0
        %819 = vmatpush1.bf16.msra.mxu0 0
        %820 = vmatprep.subr.bf16.mxu0 0
        %821 = vmatpush1.bf16.msra.mxu0 0
        %822 = vmatprep.subr.bf16.mxu0 0
        %823 = vmatpush1.bf16.msra.mxu0 0
        %824 = vmatprep.subr.bf16.mxu0 0
        %825 = vmatpush1.bf16.msra.mxu0 0
        %826 = vmatprep.subr.bf16.mxu0 0
        %827 = vmatpush1.bf16.msra.mxu0 0
        %828 = vmatprep.subr.bf16.mxu0 0
        %829 = vmatpush1.bf16.msra.mxu0 %v812
        %830 = vmatprep.subr.bf16.mxu0 0
        %831 = vmatpush2.bf16.msra.mxu0 0
        %832 = vmatprep.subr.bf16.mxu0 0
        %833 = vmatpush2.bf16.msra.mxu0 0
        %834 = vmatprep.subr.bf16.mxu0 0
        %835 = vmatpush2.bf16.msra.mxu0 0
        %836 = vmatprep.subr.bf16.mxu0 0
        %837 = vmatpush2.bf16.msra.mxu0 0
        %838 = vmatprep.subr.bf16.mxu0 0
        %839 = vmatpush2.bf16.msra.mxu0 0
        %840 = vmatprep.subr.bf16.mxu0 0
        %841 = vmatpush2.bf16.msra.mxu0 0
        %842 = vmatprep.subr.bf16.mxu0 0
        %843 = vmatpush2.bf16.msra.mxu0 0
        %844 = vmatprep.subr.bf16.mxu0 0
        %845 = vmatpush2.bf16.msra.mxu0 0
        %846 = vmatprep.mubr.bf16.mxu0 0
        %847 = vmatmul.mubr.bf16.gmra.mxu0 %v809
        %v848 = vpop.f32.mrf.mxu0
        %v849 = vadd.f32 0.0, %v848
        %v850 = vpop.f32.mrf.mxu0
        %v851 = vpop.f32.mrf.mxu0
        %v852 = vpop.f32.mrf.mxu0
        %853 = vdwg.mxu0
        %v854 = vpack.c.bf16 %v849, %v849
        %v856 = vunpack.c.l.b16 %v854
        %v857 = vpack.c.b16 %v856, %v856
        %858 = vrot.lane.b32.xlu0 %v857, 24
        %v859 = vpop.permute.xlu0 %858
        %vm861 = vcmask 257216
        %862 = vst.msk [vmem:[#allocation3] sm:$0xf] %vm861, %v859
        %v863 = vld [vmem:[#allocation3] sm:$0xf]
        %v864 = vld [vmem:[#allocation9] sm:$0xf]
        %v865 = vld [vmem:[#allocation9 + $0x4] sm:$0xf]
        %v866 = vld [vmem:[#allocation9 + $0x8] sm:$0xf]
        %v867 = vld [vmem:[#allocation9 + $0xc] sm:$0xf]
        %v868 = vld [vmem:[%s4] sm:$0x1]
        %v870 = vlaneseq
        %v871 = vshrl.u32 %v870, 7
        %v872 = vsub.s32 0, %v871
        %v873 = vrot.slane %v868, %v872
        %v879 = vunpack.c.l.b16 %v864
        %v880 = vunpack.c.l.b16 %v865
        %v881 = vunpack.c.l.b16 %v866
        %v882 = vunpack.c.l.b16 %v867
        %v883 = vpack.c.b16 %v880, %v879
        %v884 = vpack.c.b16 %v882, %v881
        %vm887 = vcmask 261120
        %v889 = vsel %vm887, %v863, 0
        %891 = vmatprep.subr.bf16.mxu0 0
        %892 = vmatpush1.bf16.msra.mxu0 0
        %893 = vmatprep.subr.bf16.mxu0 0
        %894 = vmatpush1.bf16.msra.mxu0 0
        %895 = vmatprep.subr.bf16.mxu0 0
        %896 = vmatpush1.bf16.msra.mxu0 0
        %897 = vmatprep.subr.bf16.mxu0 0
        %898 = vmatpush1.bf16.msra.mxu0 0
        %899 = vmatprep.subr.bf16.mxu0 0
        %900 = vmatpush1.bf16.msra.mxu0 0
        %901 = vmatprep.subr.bf16.mxu0 0
        %902 = vmatpush1.bf16.msra.mxu0 0
        %903 = vmatprep.subr.bf16.mxu0 0
        %904 = vmatpush1.bf16.msra.mxu0 %v884
        %905 = vmatprep.subr.bf16.mxu0 0
        %906 = vmatpush1.bf16.msra.mxu0 %v883
        %907 = vmatprep.subr.bf16.mxu0 0
        %908 = vmatpush2.bf16.msra.mxu0 0
        %909 = vmatprep.subr.bf16.mxu0 0
        %910 = vmatpush2.bf16.msra.mxu0 0
        %911 = vmatprep.subr.bf16.mxu0 0
        %912 = vmatpush2.bf16.msra.mxu0 0
        %913 = vmatprep.subr.bf16.mxu0 0
        %914 = vmatpush2.bf16.msra.mxu0 0
        %915 = vmatprep.subr.bf16.mxu0 0
        %916 = vmatpush2.bf16.msra.mxu0 0
        %917 = vmatprep.subr.bf16.mxu0 0
        %918 = vmatpush2.bf16.msra.mxu0 0
        %919 = vmatprep.subr.bf16.mxu0 0
        %920 = vmatpush2.bf16.msra.mxu0 0
        %921 = vmatprep.subr.bf16.mxu0 0
        %922 = vmatpush2.bf16.msra.mxu0 0
        %923 = vmatprep.mubr.bf16.mxu0 0
        %924 = vmatmul.mubr.bf16.gmra.mxu0 %v889
        %v925 = vpop.f32.mrf.mxu0
        %v926 = vadd.f32 %v873, %v925
        %v927 = vpop.f32.mrf.mxu0
        %v928 = vpop.f32.mrf.mxu0
        %v929 = vpop.f32.mrf.mxu0
        %930 = vdwg.mxu0
        %931 = vst.msk [vmem:[%s282] sm:$0xff] %vm887, %v926
        %s932 = sand.u32 %s155, 1
        %s933 = scalar_lea.sflag [#allocation6], %s932
        %s934 = sand.u32 %s155, 1
        %s935 = smul.addr %s934, 8
        %s936 = scalar_lea.vmem [#allocation10], %s935
        // Predicated region
        $region57: #{tpu_custom_call.1} parent=39 // pred_check
          %p937 = pneg %p165
        $region58: #{tpu_custom_call.1} parent=39 // pred_check_branch
          %939 = sbr.rel (%p937) target = $region60
        $region59: #{tpu_custom_call.1} parent=39 // pred_region
          %s941 = ssub.s32 128, 128
          %942 = vsyncadd %s933, %s941
          %s943 = sadd.s32 %s28, %s27
          %s944 = smul.addr %s943, 128
          %s945 = scalar_lea.hbm %s5, %s944
          %s947 = sshll.u32 %s936, 4
          %s948 = int_to_ptr.vmem [resolvable:$true] %s947
          %950 = dma.vmem_to_hbm [thread:$0]  %s948, 128, %s945, %s933
        $region60: #{tpu_custom_call.1} parent=39 // pred_fallthru
          _
      $region40: #{tpu_custom_call.1} parent=5 // pred_fallthru
        _
      %p951 = scmp.le.s32.totalorder 2, %s18
      // Predicated region
      $region61: #{tpu_custom_call.1} parent=5 // pred_check
        %p952 = pneg %p951
      $region62: #{tpu_custom_call.1} parent=5 // pred_check_branch
        %954 = sbr.rel (%p952) target = $region64
      $region63: #{tpu_custom_call.1} parent=5 // pred_region
        %s955 = ssub.s32 %s18, 2
        // Predicated region
        $region65: #{tpu_custom_call.1} parent=63 // pred_check
          %p956 = pneg %p171
        $region66: #{tpu_custom_call.1} parent=63 // pred_check_branch
          %958 = sbr.rel (%p956) target = $region68
        $region67: #{tpu_custom_call.1} parent=63 // pred_region
          %s959 = sand.u32 %s156, 1
          %s960 = scalar_lea.sflag [#allocation6], %s959
          %s961 = sand.u32 %s156, 1
          %s962 = smul.addr %s961, 8
          %s963 = scalar_lea.vmem [#allocation10], %s962
          %964 = dma.done %s960, 128
        $region68: #{tpu_custom_call.1} parent=63 // pred_fallthru
          _
      $region64: #{tpu_custom_call.1} parent=5 // pred_fallthru
        _
    $region6: #{tpu_custom_call.1} parent=1 // loop_footer
      %s22 = sadd.s32 1, %s18
    $region7: #{tpu_custom_call.1} parent=1 // loop_footer_branch
      %17 = sbr.rel target = $region3
    $region8: #{tpu_custom_call.1} parent=1 // loop_exit
      _
    %965 = vsyncpa [#allocation5], 1
    %s966 = scalar_lea.sflag [#allocation5], 1
    %967 = vsyncpa %s966, 1
    %968 = vsyncpa [#allocation8], 1
    %969 = vsyncpa [#allocation6], 1
    %s970 = scalar_lea.sflag [#allocation6], 1
    %971 = vsyncpa %s970, 1

</llo_original>
